<compile_context>
chip_gen: v5e
topology: v5e:2x2
jax: 0.10.0
libtpu: 0.0.40
codegen_flags: <defaults>
</compile_context>

<pallas_src>
import numpy as np
import jax
import jax.numpy as jnp
from jax.experimental import pallas as pl
from jax.experimental.pallas import tpu as pltpu


CFG = [8, "M", 16]
OUT_HW = 7


# ----------------------------------------------------------------------------
# Host-side (one-off) weight / pooling-matrix preparation
# ----------------------------------------------------------------------------
def _adaptive_pool_matrix(in_size, out_size):
    """P[o, i] such that out = P @ x matches nn.AdaptiveAvgPool along one dim."""
    p = np.zeros((out_size, in_size), np.float32)
    for i in range(out_size):
        start = (i * in_size) // out_size
        end = -(-((i + 1) * in_size) // out_size)          # ceil
        p[i, start:end] = 1.0 / (end - start)
    return p


def _banded_conv_weight(w_hwio, in_cols, in_col_stride, out_cols):
    """(3,3,Cin,Cout) HWIO -> (3*in_cols*in_col_stride, out_cols*Cout) band.

    Input rows are laid out with column wi at lane offset wi*in_col_stride
    (channels minor).  The three kernel rows (ky) are stacked along K so each
    conv is ONE matmul; left/right (W) zero padding is folded into the band
    by omitting out-of-range taps (only H padding remains on the activation).
    """
    kh, kw, cin, cout = w_hwio.shape
    k_per_ky = in_cols * in_col_stride
    band = np.zeros((kh * k_per_ky, out_cols * cout), np.float32)
    w_np = np.asarray(w_hwio, np.float32)
    for ky in range(kh):
        for wo in range(out_cols):
            for kx in range(kw):
                wi = wo + kx - 1
                if 0 <= wi < in_cols:
                    r0 = ky * k_per_ky + wi * in_col_stride
                    band[r0:r0 + cin, wo * cout:(wo + 1) * cout] = w_np[ky, kx]
    return band


def _pick_batch_block(n, h):
    """Images per grid step: target ~128 matmul rows (M) but keep >= 2 grid
    steps when possible so both v7x TensorCores get work."""
    b = max(1, min(n, max(1, 128 // h)))
    if n >= 2:
        b = min(b, max(1, n // 2))
    while n % b:
        b -= 1
    return b


# ----------------------------------------------------------------------------
# Fused kernel: conv1+ReLU -> maxpool2x2 -> conv2+ReLU -> adaptive avgpool 7x7
# One block of B images per grid step; everything stays in VMEM / vregs.
# ----------------------------------------------------------------------------
def _make_fused_kernel(B, H, W, Cin, C1, C2, out_hw, out_lanes):
    H2 = H // 2
    WC1 = W * C1
    K1 = 3 * W * Cin

    def kernel(x_ref, w1_ref, b1_ref, w2_ref, b2_ref, phb_ref, q_ref,
               o_ref, pad2_ref):
        # ---- conv1 (3x3, pad=1) + ReLU: ONE merged-ky banded matmul ---------
        # x is host-side H-padded / im2row'd / bf16; W padding lives in w1.
        lhs1 = x_ref[...].reshape(B * H, K1)                     # bf16
        a1 = jnp.dot(lhs1, w1_ref[...], preferred_element_type=jnp.float32)
        a1 = jnp.maximum(a1 + b1_ref[...], 0.0)                  # (B*H, W*C1)

        # ---- maxpool 2x2 ------------------------------------------------------
        # H: pairwise row max.  W: lane-roll max, leaving pooled values at
        # lane stride 2*C1 (no compaction); w2's structural zeros skip the
        # garbage lanes.
        a1r = a1.reshape(B * H2, 2, WC1)
        hmax = jnp.maximum(a1r[:, 0, :], a1r[:, 1, :])           # (B*H2, W*C1)
        wmax = jnp.maximum(hmax, pltpu.roll(hmax, WC1 - C1, axis=1))

        # ---- conv2 (3x3, pad=1) + ReLU: ONE merged-ky banded matmul ---------
        # Only H padding remains; re-zero the 2 border rows every step (tiny,
        # and safe with "parallel" grid semantics where a core may never see
        # program_id == 0).
        zrow = jnp.zeros((B, 1, WC1), jnp.bfloat16)
        pad2_ref[:, pl.ds(0, 1), :] = zrow
        pad2_ref[:, pl.ds(H2 + 1, 1), :] = zrow
        pad2_ref[:, pl.ds(1, H2), :] = (
            wmax.reshape(B, H2, WC1).astype(jnp.bfloat16))
        # Merged-ky lhs: three 128-lane (vreg-aligned) slabs -> K = 3*W*C1.
        lhs2 = jnp.concatenate(
            [pad2_ref[:, pl.ds(ky, H2), :] for ky in range(3)], axis=2)
        lhs2 = lhs2.reshape(B * H2, 3 * WC1)
        a3 = jnp.dot(lhs2, w2_ref[...], preferred_element_type=jnp.float32)
        a3 = jnp.maximum(a3 + b2_ref[...], 0.0)                  # (B*H2, W2*C2)

        # ---- AdaptiveAvgPool2d((7,7)): two small f32 matmuls -----------------
        # phb is block-diagonal over the stacked batch; q pools along W while
        # keeping channels lane-packed and pads the output to 128 lanes.
        pooled_h = jnp.dot(phb_ref[...], a3, preferred_element_type=jnp.float32)
        pooled = jnp.dot(pooled_h, q_ref[...], preferred_element_type=jnp.float32)
        o_ref[...] = pooled.reshape(B, out_hw, out_lanes).astype(o_ref.dtype)

    return kernel


def vgg_forward(x_nchw, params, out_hw=OUT_HW):
    (w1, b1), (w2, b2) = params
    N, Cin, H, W = x_nchw.shape
    C1 = w1.shape[-1]
    C2 = w2.shape[-1]
    assert H % 2 == 0 and W % 2 == 0
    H2, W2 = H // 2, W // 2
    WC1 = W * C1
    K1 = 3 * W * Cin
    out_lanes = -(-(out_hw * C2) // 128) * 128               # lane-dense output
    b_blk = _pick_batch_block(N, H)
    grid = (N // b_blk,)

    # --- host-side layout glue (tiny, one-off) -------------------------------
    # NCHW -> lane-packed rows, H pre-pad, ky-slab im2row, bf16 cast.
    x_rows = jnp.transpose(x_nchw, (0, 2, 3, 1)).reshape(N, H, W * Cin)
    x_pad = jnp.pad(x_rows, ((0, 0), (1, 1), (0, 0)))
    x_lhs = jnp.concatenate(
        [x_pad[:, ky:ky + H, :] for ky in range(3)], axis=-1
    ).astype(jnp.bfloat16)                                    # (N, H, 3*W*Cin)

    # Merged-ky banded conv weights (bf16), W padding folded in.
    w1_band = jnp.asarray(_banded_conv_weight(w1, W, Cin, W), jnp.bfloat16)
    w2_band = jnp.asarray(_banded_conv_weight(w2, W2, 2 * C1, W2), jnp.bfloat16)
    b1_t = jnp.asarray(np.tile(np.asarray(b1, np.float32), W))[None, :]
    b2_t = jnp.asarray(np.tile(np.asarray(b2, np.float32), W2))[None, :]

    # Adaptive-pooling matrices: block-diagonal row pool (batch-stacked M) and
    # a channel-block-diagonal column pool padded to a lane-dense 128 output.
    ph = _adaptive_pool_matrix(H2, out_hw)
    phb_np = np.zeros((b_blk * out_hw, b_blk * H2), np.float32)
    for bb in range(b_blk):
        phb_np[bb * out_hw:(bb + 1) * out_hw, bb * H2:(bb + 1) * H2] = ph
    phb = jnp.asarray(phb_np)
    pw = _adaptive_pool_matrix(W2, out_hw)
    q_np = np.zeros((W2 * C2, out_lanes), np.float32)
    for ow in range(out_hw):
        for wcol in range(W2):
            q_np[wcol * C2:(wcol + 1) * C2, ow * C2:(ow + 1) * C2] = (
                pw[ow, wcol] * np.eye(C2, dtype=np.float32))
    q = jnp.asarray(q_np)

    flops = (2 * N * H * K1 * WC1
             + 2 * N * H2 * (3 * WC1) * (W2 * C2)
             + 2 * N * out_hw * b_blk * H2 * (W2 * C2)
             + 2 * N * out_hw * (W2 * C2) * out_lanes)
    bytes_accessed = (x_lhs.size * 2 + w1_band.size * 2 + w2_band.size * 2
                      + b1_t.size * 4 + b2_t.size * 4 + phb.size * 4
                      + q.size * 4 + N * out_hw * out_lanes * 4)

    kernel = _make_fused_kernel(b_blk, H, W, Cin, C1, C2, out_hw, out_lanes)
    y = pl.pallas_call(
        kernel,
        out_shape=jax.ShapeDtypeStruct((N, out_hw, out_lanes), jnp.float32),
        grid=grid,
        in_specs=[
            pl.BlockSpec((b_blk, H, K1), lambda n: (n, 0, 0)),
            pl.BlockSpec((K1, WC1), lambda n: (0, 0)),
            pl.BlockSpec((1, WC1), lambda n: (0, 0)),
            pl.BlockSpec((3 * WC1, W2 * C2), lambda n: (0, 0)),
            pl.BlockSpec((1, W2 * C2), lambda n: (0, 0)),
            pl.BlockSpec((b_blk * out_hw, b_blk * H2), lambda n: (0, 0)),
            pl.BlockSpec((W2 * C2, out_lanes), lambda n: (0, 0)),
        ],
        out_specs=pl.BlockSpec((b_blk, out_hw, out_lanes), lambda n: (n, 0, 0)),
        scratch_shapes=[pltpu.VMEM((b_blk, H2 + 2, WC1), jnp.bfloat16)],
        compiler_params=pltpu.CompilerParams(dimension_semantics=("parallel",)),
        cost_estimate=pl.CostEstimate(flops=flops, transcendentals=0,
                                      bytes_accessed=bytes_accessed),
    )(x_lhs, w1_band, b1_t, w2_band, b2_t, phb, q)

    # (N, oh, 128) -> drop pad lanes -> PyTorch flatten order (N, C2*7*7).
    y = y[:, :, :out_hw * C2].reshape(N, out_hw, out_hw, C2)
    return jnp.transpose(y, (0, 3, 1, 2)).reshape(N, C2 * out_hw * out_hw)


# ----------------------------------------------------------------------------
# Deterministic init (kaiming_normal_ fan_out / relu, bias = 0) and reference
# ----------------------------------------------------------------------------
def init_params(key, cfg, in_ch=3):
    params = []
    c = in_ch
    for v in cfg:
        if v == "M":
            continue
        key, k1 = jax.random.split(key)
        fan_out = v * 3 * 3
        std = (2.0 / fan_out) ** 0.5
        w = jax.random.normal(k1, (3, 3, c, v), jnp.float32) * std   # HWIO
        b = jnp.zeros((v,), jnp.float32)
        params.append((w, b))
        c = v
    return params


def vgg_reference(x_nchw, cfg, params, out_hw=OUT_HW):
    x = jnp.transpose(x_nchw, (0, 2, 3, 1))
    pi = 0
    for v in cfg:
        if v == "M":
            N, H, W, C = x.shape
            x = x.reshape(N, H // 2, 2, W // 2, 2, C).max(axis=(2, 4))
        else:
            w, b = params[pi]
            pi += 1
            x = jax.lax.conv_general_dilated(
                x, w, (1, 1), ((1, 1), (1, 1)),
                dimension_numbers=("NHWC", "HWIO", "NHWC")) + b
            x = jnp.maximum(x, 0.0)
    N, H, W, C = x.shape
    ph = jnp.asarray(_adaptive_pool_matrix(H, out_hw))
    pw = jnp.asarray(_adaptive_pool_matrix(W, out_hw))
    y = jnp.einsum("nhwc,oh,pw->nopc", x, ph, pw)
    return jnp.transpose(y, (0, 3, 1, 2)).reshape(N, -1)


if __name__ == "__main__":
    key = jax.random.PRNGKey(0)
    key, kx = jax.random.split(key)
    # batch=8 exercises the batch-stacking path (B_blk=4, 2 parallel steps).
    x = jax.random.normal(kx, (8, 3, 16, 16), jnp.float32)   # NCHW, like PyTorch
    params = init_params(jax.random.PRNGKey(1), CFG, in_ch=3)

    out = jax.block_until_ready(vgg_forward(x, params))
    assert out.shape == (8, 16 * 7 * 7), out.shape

    ref = vgg_reference(x, CFG, params)
    # bf16 MXU operands with f32 accumulation -> slightly looser tolerance.
    np.testing.assert_allclose(np.asarray(out), np.asarray(ref),
                               rtol=3e-2, atol=3e-2)
    print("KERNEL_OK")
</pallas_src>

<mosaic_0001>
module attributes {stable_mosaic.version = 11 : i64} {
  func.func @kernel(%arg0: i32, %arg1: memref<4x16x144xbf16, #tpu.memory_space<vmem>>, %arg2: memref<144x128xbf16, #tpu.memory_space<vmem>>, %arg3: memref<1x128xf32, #tpu.memory_space<vmem>>, %arg4: memref<384x128xbf16, #tpu.memory_space<vmem>>, %arg5: memref<1x128xf32, #tpu.memory_space<vmem>>, %arg6: memref<28x32xf32, #tpu.memory_space<vmem>>, %arg7: memref<128x128xf32, #tpu.memory_space<vmem>>, %arg8: memref<4x7x128xf32, #tpu.memory_space<vmem>>, %arg9: memref<4x10x128xbf16, #tpu.memory_space<vmem>>) attributes {dimension_semantics = [#tpu.dimension_semantics<parallel>], iteration_bounds = array<i64: 2>, scalar_prefetch = 0 : i64, scratch_operands = 1 : i64, tpu.core_type = #tpu.core_type<tc>, window_params = [{transform_indices = @transform_0, window_bounds = array<i64: 4, 16, 144>}, {pipeline_mode = #tpu.pipeline_mode<synchronous>, transform_indices = @transform_1, window_bounds = array<i64: 144, 128>}, {pipeline_mode = #tpu.pipeline_mode<synchronous>, transform_indices = @transform_2, window_bounds = array<i64: 1, 128>}, {pipeline_mode = #tpu.pipeline_mode<synchronous>, transform_indices = @transform_3, window_bounds = array<i64: 384, 128>}, {pipeline_mode = #tpu.pipeline_mode<synchronous>, transform_indices = @transform_4, window_bounds = array<i64: 1, 128>}, {pipeline_mode = #tpu.pipeline_mode<synchronous>, transform_indices = @transform_5, window_bounds = array<i64: 28, 32>}, {pipeline_mode = #tpu.pipeline_mode<synchronous>, transform_indices = @transform_6, window_bounds = array<i64: 128, 128>}, {transform_indices = @transform_7, window_bounds = array<i64: 4, 7, 128>}]} {
    %c0 = arith.constant 0 : index
    %c0_0 = arith.constant 0 : index
    %c0_1 = arith.constant 0 : index
    %0 = vector.load %arg1[%c0, %c0_0, %c0_1] : memref<4x16x144xbf16, #tpu.memory_space<vmem>>, vector<4x16x144xbf16>
    %1 = vector.shape_cast %0 : vector<4x16x144xbf16> to vector<64x144xbf16>
    %c0_2 = arith.constant 0 : index
    %c0_3 = arith.constant 0 : index
    %2 = vector.load %arg2[%c0_2, %c0_3] : memref<144x128xbf16, #tpu.memory_space<vmem>>, vector<144x128xbf16>
    %cst = arith.constant dense<0.000000e+00> : vector<64x128xf32>
    %3 = tpu.matmul %1, %2, %cst {dimension_numbers = #tpu.dot_dimension_numbers<[1], [0], [0], [1], [0, 0, 1, 1], [], []>} : vector<64x144xbf16>, vector<144x128xbf16>, vector<64x128xf32> -> vector<64x128xf32>
    %c0_4 = arith.constant 0 : index
    %c0_5 = arith.constant 0 : index
    %4 = vector.load %arg3[%c0_4, %c0_5] : memref<1x128xf32, #tpu.memory_space<vmem>>, vector<1x128xf32>
    %5 = vector.broadcast %4 : vector<1x128xf32> to vector<64x128xf32>
    %6 = arith.addf %3, %5 : vector<64x128xf32>
    %cst_6 = arith.constant 0.000000e+00 : f32
    %7 = vector.broadcast %cst_6 : f32 to vector<64x128xf32>
    %8 = arith.maximumf %6, %7 : vector<64x128xf32>
    %9 = vector.shape_cast %8 : vector<64x128xf32> to vector<32x2x128xf32>
    %10 = vector.extract_strided_slice %9 {offsets = [0, 0, 0], sizes = [32, 1, 128], strides = [1, 1, 1]} : vector<32x2x128xf32> to vector<32x1x128xf32>
    %11 = vector.shape_cast %10 : vector<32x1x128xf32> to vector<32x128xf32>
    %12 = vector.extract_strided_slice %9 {offsets = [0, 1, 0], sizes = [32, 1, 128], strides = [1, 1, 1]} : vector<32x2x128xf32> to vector<32x1x128xf32>
    %13 = vector.shape_cast %12 : vector<32x1x128xf32> to vector<32x128xf32>
    %14 = arith.maximumf %11, %13 : vector<32x128xf32>
    %c120_i32 = arith.constant 120 : i32
    %15 = tpu.dynamic_rotate %14 by %c120_i32 dim 1 : vector<32x128xf32>, i32 -> vector<32x128xf32>
    %16 = arith.maximumf %14, %15 : vector<32x128xf32>
    %cst_7 = arith.constant 0.000000e+00 : bf16
    %17 = vector.broadcast %cst_7 : bf16 to vector<4x1x128xbf16>
    %c0_8 = arith.constant 0 : index
    %c0_9 = arith.constant 0 : index
    %c0_10 = arith.constant 0 : index
    %18 = vector.load %arg9[%c0_8, %c0_9, %c0_10] : memref<4x10x128xbf16, #tpu.memory_space<vmem>>, vector<4x1x128xbf16>
    tpu.vector_store %arg9[%c0_8, %c0_9, %c0_10], %17 {strides = array<i32>} : memref<4x10x128xbf16, #tpu.memory_space<vmem>>, vector<4x1x128xbf16>,
    %c0_11 = arith.constant 0 : index
    %c9 = arith.constant 9 : index
    %c0_12 = arith.constant 0 : index
    %19 = vector.load %arg9[%c0_11, %c9, %c0_12] : memref<4x10x128xbf16, #tpu.memory_space<vmem>>, vector<4x1x128xbf16>
    tpu.vector_store %arg9[%c0_11, %c9, %c0_12], %17 {strides = array<i32>} : memref<4x10x128xbf16, #tpu.memory_space<vmem>>, vector<4x1x128xbf16>,
    %20 = vector.shape_cast %16 : vector<32x128xf32> to vector<4x8x128xf32>
    %21 = arith.truncf %20 : vector<4x8x128xf32> to vector<4x8x128xbf16>
    %c0_13 = arith.constant 0 : index
    %c1 = arith.constant 1 : index
    %c0_14 = arith.constant 0 : index
    %22 = vector.load %arg9[%c0_13, %c1, %c0_14] : memref<4x10x128xbf16, #tpu.memory_space<vmem>>, vector<4x8x128xbf16>
    tpu.vector_store %arg9[%c0_13, %c1, %c0_14], %21 {strides = array<i32>} : memref<4x10x128xbf16, #tpu.memory_space<vmem>>, vector<4x8x128xbf16>,
    %c0_15 = arith.constant 0 : index
    %c0_16 = arith.constant 0 : index
    %c0_17 = arith.constant 0 : index
    %23 = vector.load %arg9[%c0_15, %c0_16, %c0_17] : memref<4x10x128xbf16, #tpu.memory_space<vmem>>, vector<4x8x128xbf16>
    %c0_18 = arith.constant 0 : index
    %c1_19 = arith.constant 1 : index
    %c0_20 = arith.constant 0 : index
    %24 = vector.load %arg9[%c0_18, %c1_19, %c0_20] : memref<4x10x128xbf16, #tpu.memory_space<vmem>>, vector<4x8x128xbf16>
    %c0_21 = arith.constant 0 : index
    %c2 = arith.constant 2 : index
    %c0_22 = arith.constant 0 : index
    %25 = vector.load %arg9[%c0_21, %c2, %c0_22] : memref<4x10x128xbf16, #tpu.memory_space<vmem>>, vector<4x8x128xbf16>
    %26 = tpu.concatenate %23, %24, %25 in 2 : vector<4x8x128xbf16>, vector<4x8x128xbf16>, vector<4x8x128xbf16> -> vector<4x8x384xbf16>
    %27 = vector.shape_cast %26 : vector<4x8x384xbf16> to vector<32x384xbf16>
    %c0_23 = arith.constant 0 : index
    %c0_24 = arith.constant 0 : index
    %28 = vector.load %arg4[%c0_23, %c0_24] : memref<384x128xbf16, #tpu.memory_space<vmem>>, vector<384x128xbf16>
    %cst_25 = arith.constant dense<0.000000e+00> : vector<32x128xf32>
    %29 = tpu.matmul %27, %28, %cst_25 {dimension_numbers = #tpu.dot_dimension_numbers<[1], [0], [0], [1], [0, 0, 1, 1], [], []>} : vector<32x384xbf16>, vector<384x128xbf16>, vector<32x128xf32> -> vector<32x128xf32>
    %c0_26 = arith.constant 0 : index
    %c0_27 = arith.constant 0 : index
    %30 = vector.load %arg5[%c0_26, %c0_27] : memref<1x128xf32, #tpu.memory_space<vmem>>, vector<1x128xf32>
    %31 = vector.broadcast %30 : vector<1x128xf32> to vector<32x128xf32>
    %32 = arith.addf %29, %31 : vector<32x128xf32>
    %cst_28 = arith.constant 0.000000e+00 : f32
    %33 = vector.broadcast %cst_28 : f32 to vector<32x128xf32>
    %34 = arith.maximumf %32, %33 : vector<32x128xf32>
    %c0_29 = arith.constant 0 : index
    %c0_30 = arith.constant 0 : index
    %35 = vector.load %arg6[%c0_29, %c0_30] : memref<28x32xf32, #tpu.memory_space<vmem>>, vector<28x32xf32>
    %cst_31 = arith.constant dense<0.000000e+00> : vector<28x128xf32>
    %36 = tpu.matmul %35, %34, %cst_31 {dimension_numbers = #tpu.dot_dimension_numbers<[1], [0], [0], [1], [0, 0, 1, 1], [], []>} : vector<28x32xf32>, vector<32x128xf32>, vector<28x128xf32> -> vector<28x128xf32>
    %c0_32 = arith.constant 0 : index
    %c0_33 = arith.constant 0 : index
    %37 = vector.load %arg7[%c0_32, %c0_33] : memref<128x128xf32, #tpu.memory_space<vmem>>, vector<128x128xf32>
    %cst_34 = arith.constant dense<0.000000e+00> : vector<28x128xf32>
    %38 = tpu.matmul %36, %37, %cst_34 {dimension_numbers = #tpu.dot_dimension_numbers<[1], [0], [0], [1], [0, 0, 1, 1], [], []>} : vector<28x128xf32>, vector<128x128xf32>, vector<28x128xf32> -> vector<28x128xf32>
    %39 = vector.shape_cast %38 : vector<28x128xf32> to vector<4x7x128xf32>
    %c0_35 = arith.constant 0 : index
    %c0_36 = arith.constant 0 : index
    %c0_37 = arith.constant 0 : index
    %40 = vector.load %arg8[%c0_35, %c0_36, %c0_37] : memref<4x7x128xf32, #tpu.memory_space<vmem>>, vector<4x7x128xf32>
    tpu.vector_store %arg8[%c0_35, %c0_36, %c0_37], %39 {strides = array<i32>} : memref<4x7x128xf32, #tpu.memory_space<vmem>>, vector<4x7x128xf32>,
    return
  }
  func.func @transform_0(%arg0: i32) -> (i32, i32, i32) {
    %c0_i32 = arith.constant 0 : i32
    %c0_i32_0 = arith.constant 0 : i32
    %c0_i32_1 = arith.constant 0 : i32
    return %arg0, %c0_i32, %c0_i32_0 : i32, i32, i32
  }
  func.func @transform_1(%arg0: i32) -> (i32, i32) {
    %c0_i32 = arith.constant 0 : i32
    %c0_i32_0 = arith.constant 0 : i32
    %c0_i32_1 = arith.constant 0 : i32
    return %c0_i32, %c0_i32_0 : i32, i32
  }
  func.func @transform_2(%arg0: i32) -> (i32, i32) {
    %c0_i32 = arith.constant 0 : i32
    %c0_i32_0 = arith.constant 0 : i32
    %c0_i32_1 = arith.constant 0 : i32
    return %c0_i32, %c0_i32_0 : i32, i32
  }
  func.func @transform_3(%arg0: i32) -> (i32, i32) {
    %c0_i32 = arith.constant 0 : i32
    %c0_i32_0 = arith.constant 0 : i32
    %c0_i32_1 = arith.constant 0 : i32
    return %c0_i32, %c0_i32_0 : i32, i32
  }
  func.func @transform_4(%arg0: i32) -> (i32, i32) {
    %c0_i32 = arith.constant 0 : i32
    %c0_i32_0 = arith.constant 0 : i32
    %c0_i32_1 = arith.constant 0 : i32
    return %c0_i32, %c0_i32_0 : i32, i32
  }
  func.func @transform_5(%arg0: i32) -> (i32, i32) {
    %c0_i32 = arith.constant 0 : i32
    %c0_i32_0 = arith.constant 0 : i32
    %c0_i32_1 = arith.constant 0 : i32
    return %c0_i32, %c0_i32_0 : i32, i32
  }
  func.func @transform_6(%arg0: i32) -> (i32, i32) {
    %c0_i32 = arith.constant 0 : i32
    %c0_i32_0 = arith.constant 0 : i32
    %c0_i32_1 = arith.constant 0 : i32
    return %c0_i32, %c0_i32_0 : i32, i32
  }
  func.func @transform_7(%arg0: i32) -> (i32, i32, i32) {
    %c0_i32 = arith.constant 0 : i32
    %c0_i32_0 = arith.constant 0 : i32
    %c0_i32_1 = arith.constant 0 : i32
    return %arg0, %c0_i32, %c0_i32_0 : i32, i32, i32
  }
}

</mosaic_0001>

<llo_original>
// kernel: tpu_custom_call.1
$region0: #{tpu_custom_call.1}
  #allocation0 [shape = 'u32[]', space=smem, size = 0x4, offset = 0x4, fixed_abs, tag = 'smem constant byte address 0x4 - core index']
  #allocation1 [shape = 'u32[72,128]{1,0:T(1,128)}', space=vmem, size = 0x9000, scoped, tag = 'internal scratch']
  #allocation2 [shape = 'bf16[4,10,128]{2,1,0:T(8,128)(2,1)}', space=vmem, size = 0x4000, scoped, tag = 'scratch operand']
  %s0 = inlined_call_operand.hbm [shape: bf16[8,16,144], index: 0, kind: input, shape index: {}]
  %s1 = inlined_call_operand.hbm [shape: bf16[144,128], index: 1, kind: input, shape index: {}]
  %s2 = inlined_call_operand.vmem [shape: f32[1,128], index: 2, kind: input, shape index: {}]
  %s3 = inlined_call_operand.hbm [shape: bf16[384,128], index: 3, kind: input, shape index: {}]
  %s4 = inlined_call_operand.vmem [shape: f32[1,128], index: 4, kind: input, shape index: {}]
  %s5 = inlined_call_operand.hbm [shape: f32[28,32], index: 5, kind: input, shape index: {}]
  %s6 = inlined_call_operand.hbm [shape: f32[128,128], index: 6, kind: input, shape index: {}]
  %s7 = inlined_call_operand.vmem [shape: f32[8,7,128], index: 7, kind: output, shape index: {}]
  %s8 = sld [smem:[#allocation0]]
  $region81: #{tpu_custom_call.1} parent=0
    _
  %s10 = ssub.s32 1, %s8
  %s11 = scalar_select 0, %s10, %s8
  $region1: #{tpu_custom_call.1} parent=0
    #allocation3 [shape = 'u8[65536]{0}', space=vmem, size = 0x10000, scoped, tag = 'input window, operand 0']
    #allocation4 [shape = 's32[2]{0}', space=sflag, size = 0x8, scoped, tag = 'scoped memory for tpu_custom_call.1']
    #allocation5 [shape = 'u8[36864]{0}', space=vmem, size = 0x9000, scoped, tag = 'input window, operand 1, single buffered']
    #allocation6 [shape = 's32[1]{0}', space=sflag, size = 0x4, scoped, tag = 'scoped memory for tpu_custom_call.1']
    #allocation7 [shape = 'u8[98304]{0}', space=vmem, size = 0x18000, scoped, tag = 'input window, operand 3, single buffered']
    #allocation8 [shape = 'u8[16384]{0}', space=vmem, size = 0x4000, scoped, tag = 'input window, operand 5, single buffered']
    #allocation9 [shape = 's32[1]{0}', space=sflag, size = 0x4, scoped, tag = 'scoped memory for tpu_custom_call.1']
    #allocation10 [shape = 'u8[65536]{0}', space=vmem, size = 0x10000, scoped, tag = 'input window, operand 6, single buffered']
    %12 = vsyncpa [#allocation4], 0
    %s13 = scalar_lea.sflag [#allocation4], 1
    %14 = vsyncpa %s13, 0
    %15 = vsyncpa [#allocation6], 0
    %16 = vsyncpa [#allocation9], 0
    loop: start=0, step=1, limit=4
    $region2: #{tpu_custom_call.1} parent=1 // loop_pre_header
      _
    $region3: #{tpu_custom_call.1} parent=1 // loop_header
      %s18 = sphi 0, %s22
      %p19 = scmp.ge.s32.totalorder %s18, 4
      %s28 = sphi 0, %s30
      %s31 = sphi 0, %s28
      %s32 = sphi 0, %s31
      %s48 = sphi 0, %s32
      %s52 = sphi 0, %s52
      %s54 = sphi 0, %s52
      %s55 = sphi 0, %s54
      %s69 = sphi 0, %s55
      %s73 = sphi 0, %s73
      %s75 = sphi 0, %s73
      %s76 = sphi 0, %s75
      %s90 = sphi 0, %s76
      %s94 = sphi 0, %s94
      %s96 = sphi 0, %s94
      %s97 = sphi 0, %s96
      %s111 = sphi 0, %s97
      %s115 = sphi 0, %s115
      %s117 = sphi 0, %s115
      %s118 = sphi 0, %s117
      %s132 = sphi 0, %s118
      %s136 = sphi 0, %s136
      %s138 = sphi 0, %s136
      %s139 = sphi 0, %s138
      %s153 = sphi 0, %s139
      %s157 = sphi 0, %s157
      %s159 = sphi 0, %s157
      %s160 = sphi 0, %s159
      %s174 = sphi 0, %s160
      %s180 = sphi 0, %s182
      %s183 = sphi 0, %s180
      %s184 = sphi 0, %s183
      %s200 = sphi 0, %s184
    $region4: #{tpu_custom_call.1} parent=1 // loop_header_branch
      %21 = sbr.rel (%p19) target = $region8
    $region5: #{tpu_custom_call.1} parent=1 // loop_body
      %s23 = ssub.s32 %s18, 1
      %s24 = ssub.s32 %s18, 2
      %s25 = sadd.s32 %s18, 1
      %s26 = ssub.s32 %s18, %s25
      %p27 = scmp.eq.s32.totalorder %s26, 0
      %s29 = sadd.s32 %s28, 1
      %s30 = scalar_select %p27, %s28, %s29
      %p33 = pneg %p27
      %p34 = scmp.eq.s32.totalorder %s18, 1
      %p35 = por %p33, %p34
      %p36 = scmp.ne.s32.totalorder %s28, %s31
      %p37 = scmp.eq.s32.totalorder %s18, 0
      %p38 = por %p36, %p37
      %p39 = scmp.ne.s32.totalorder %s28, %s31
      %p40 = scmp.eq.s32.totalorder %s23, 1
      %p41 = por %p39, %p40
      %p42 = scmp.ne.s32.totalorder %s31, %s32
      %p43 = scmp.eq.s32.totalorder %s23, 0
      %p44 = por %p42, %p43
      %p45 = scmp.ne.s32.totalorder %s31, %s32
      %p46 = scmp.eq.s32.totalorder %s24, 1
      %p47 = por %p45, %p46
      %p49 = scmp.ne.s32.totalorder %s32, %s48
      %p50 = scmp.eq.s32.totalorder %s24, 0
      %p51 = por %p49, %p50
      %s53 = sadd.s32 %s52, 1
      %p56 = scmp.eq.s32.totalorder %s18, 1
      %p57 = scmp.ne.s32.totalorder %s52, %s54
      %p58 = scmp.eq.s32.totalorder %s18, 0
      %p59 = por %p57, %p58
      %p60 = scmp.ne.s32.totalorder %s52, %s54
      %p61 = scmp.eq.s32.totalorder %s23, 1
      %p62 = por %p60, %p61
      %p63 = scmp.ne.s32.totalorder %s54, %s55
      %p64 = scmp.eq.s32.totalorder %s23, 0
      %p65 = por %p63, %p64
      %p66 = scmp.ne.s32.totalorder %s54, %s55
      %p67 = scmp.eq.s32.totalorder %s24, 1
      %p68 = por %p66, %p67
      %p70 = scmp.ne.s32.totalorder %s55, %s69
      %p71 = scmp.eq.s32.totalorder %s24, 0
      %p72 = por %p70, %p71
      %s74 = sadd.s32 %s73, 1
      %p77 = scmp.eq.s32.totalorder %s18, 1
      %p78 = scmp.ne.s32.totalorder %s73, %s75
      %p79 = scmp.eq.s32.totalorder %s18, 0
      %p80 = por %p78, %p79
      %p81 = scmp.ne.s32.totalorder %s73, %s75
      %p82 = scmp.eq.s32.totalorder %s23, 1
      %p83 = por %p81, %p82
      %p84 = scmp.ne.s32.totalorder %s75, %s76
      %p85 = scmp.eq.s32.totalorder %s23, 0
      %p86 = por %p84, %p85
      %p87 = scmp.ne.s32.totalorder %s75, %s76
      %p88 = scmp.eq.s32.totalorder %s24, 1
      %p89 = por %p87, %p88
      %p91 = scmp.ne.s32.totalorder %s76, %s90
      %p92 = scmp.eq.s32.totalorder %s24, 0
      %p93 = por %p91, %p92
      %s95 = sadd.s32 %s94, 1
      %p98 = scmp.eq.s32.totalorder %s18, 1
      %p99 = scmp.ne.s32.totalorder %s94, %s96
      %p100 = scmp.eq.s32.totalorder %s18, 0
      %p101 = por %p99, %p100
      %p102 = scmp.ne.s32.totalorder %s94, %s96
      %p103 = scmp.eq.s32.totalorder %s23, 1
      %p104 = por %p102, %p103
      %p105 = scmp.ne.s32.totalorder %s96, %s97
      %p106 = scmp.eq.s32.totalorder %s23, 0
      %p107 = por %p105, %p106
      %p108 = scmp.ne.s32.totalorder %s96, %s97
      %p109 = scmp.eq.s32.totalorder %s24, 1
      %p110 = por %p108, %p109
      %p112 = scmp.ne.s32.totalorder %s97, %s111
      %p113 = scmp.eq.s32.totalorder %s24, 0
      %p114 = por %p112, %p113
      %s116 = sadd.s32 %s115, 1
      %p119 = scmp.eq.s32.totalorder %s18, 1
      %p120 = scmp.ne.s32.totalorder %s115, %s117
      %p121 = scmp.eq.s32.totalorder %s18, 0
      %p122 = por %p120, %p121
      %p123 = scmp.ne.s32.totalorder %s115, %s117
      %p124 = scmp.eq.s32.totalorder %s23, 1
      %p125 = por %p123, %p124
      %p126 = scmp.ne.s32.totalorder %s117, %s118
      %p127 = scmp.eq.s32.totalorder %s23, 0
      %p128 = por %p126, %p127
      %p129 = scmp.ne.s32.totalorder %s117, %s118
      %p130 = scmp.eq.s32.totalorder %s24, 1
      %p131 = por %p129, %p130
      %p133 = scmp.ne.s32.totalorder %s118, %s132
      %p134 = scmp.eq.s32.totalorder %s24, 0
      %p135 = por %p133, %p134
      %s137 = sadd.s32 %s136, 1
      %p140 = scmp.eq.s32.totalorder %s18, 1
      %p141 = scmp.ne.s32.totalorder %s136, %s138
      %p142 = scmp.eq.s32.totalorder %s18, 0
      %p143 = por %p141, %p142
      %p144 = scmp.ne.s32.totalorder %s136, %s138
      %p145 = scmp.eq.s32.totalorder %s23, 1
      %p146 = por %p144, %p145
      %p147 = scmp.ne.s32.totalorder %s138, %s139
      %p148 = scmp.eq.s32.totalorder %s23, 0
      %p149 = por %p147, %p148
      %p150 = scmp.ne.s32.totalorder %s138, %s139
      %p151 = scmp.eq.s32.totalorder %s24, 1
      %p152 = por %p150, %p151
      %p154 = scmp.ne.s32.totalorder %s139, %s153
      %p155 = scmp.eq.s32.totalorder %s24, 0
      %p156 = por %p154, %p155
      %s158 = sadd.s32 %s157, 1
      %p161 = scmp.eq.s32.totalorder %s18, 1
      %p162 = scmp.ne.s32.totalorder %s157, %s159
      %p163 = scmp.eq.s32.totalorder %s18, 0
      %p164 = por %p162, %p163
      %p165 = scmp.ne.s32.totalorder %s157, %s159
      %p166 = scmp.eq.s32.totalorder %s23, 1
      %p167 = por %p165, %p166
      %p168 = scmp.ne.s32.totalorder %s159, %s160
      %p169 = scmp.eq.s32.totalorder %s23, 0
      %p170 = por %p168, %p169
      %p171 = scmp.ne.s32.totalorder %s159, %s160
      %p172 = scmp.eq.s32.totalorder %s24, 1
      %p173 = por %p171, %p172
      %p175 = scmp.ne.s32.totalorder %s160, %s174
      %p176 = scmp.eq.s32.totalorder %s24, 0
      %p177 = por %p175, %p176
      %s178 = ssub.s32 %s18, %s25
      %p179 = scmp.eq.s32.totalorder %s178, 0
      %s181 = sadd.s32 %s180, 1
      %s182 = scalar_select %p179, %s180, %s181
      %p185 = pneg %p179
      %p186 = scmp.eq.s32.totalorder %s18, 1
      %p187 = por %p185, %p186
      %p188 = scmp.ne.s32.totalorder %s180, %s183
      %p189 = scmp.eq.s32.totalorder %s18, 0
      %p190 = por %p188, %p189
      %p191 = scmp.ne.s32.totalorder %s180, %s183
      %p192 = scmp.eq.s32.totalorder %s23, 1
      %p193 = por %p191, %p192
      %p194 = scmp.ne.s32.totalorder %s183, %s184
      %p195 = scmp.eq.s32.totalorder %s23, 0
      %p196 = por %p194, %p195
      %p197 = scmp.ne.s32.totalorder %s183, %s184
      %p198 = scmp.eq.s32.totalorder %s24, 1
      %p199 = por %p197, %p198
      %p201 = scmp.ne.s32.totalorder %s184, %s200
      %p202 = scmp.eq.s32.totalorder %s24, 0
      %p203 = por %p201, %p202
      %p204 = scmp.le.s32.totalorder 1, %s18
      %p205 = scmp.lt.s32.totalorder %s18, 3
      %p206 = pnand %p204, %p205
      %p207 = pneg %p206
      // Predicated region
      $region9: #{tpu_custom_call.1} parent=5 // pred_check
        _
      $region10: #{tpu_custom_call.1} parent=5 // pred_check_branch
        %209 = sbr.rel (%p206) target = $region12
      $region11: #{tpu_custom_call.1} parent=5 // pred_region
        %s210 = ssub.s32 %s18, 1
        // Predicated region
        $region13: #{tpu_custom_call.1} parent=11 // pred_check
          %p211 = pneg %p65
        $region14: #{tpu_custom_call.1} parent=11 // pred_check_branch
          %213 = sbr.rel (%p211) target = $region16
        $region15: #{tpu_custom_call.1} parent=11 // pred_region
          %215 = vsyncadd [#allocation6], 0
          %s216 = sshll.u32 %s1, 4
          %s217 = int_to_ptr.hbm [resolvable:$true] %s216
          %s218 = sshll.u32 [#allocation5], 4
          %s219 = int_to_ptr.vmem [resolvable:$true] %s218
          %224 = dma.hbm_to_vmem [thread:$0]  %s217, 1152, %s219, [#allocation6], 64, 64, 4
        $region16: #{tpu_custom_call.1} parent=11 // pred_fallthru
          _
        // Predicated region
        $region17: #{tpu_custom_call.1} parent=11 // pred_check
          %p225 = pneg %p86
        $region18: #{tpu_custom_call.1} parent=11 // pred_check_branch
          %227 = sbr.rel (%p225) target = $region20
        $region19: #{tpu_custom_call.1} parent=11 // pred_region
          _
        $region20: #{tpu_custom_call.1} parent=11 // pred_fallthru
          _
        // Predicated region
        $region21: #{tpu_custom_call.1} parent=11 // pred_check
          %p228 = pneg %p107
        $region22: #{tpu_custom_call.1} parent=11 // pred_check_branch
          %230 = sbr.rel (%p228) target = $region24
        $region23: #{tpu_custom_call.1} parent=11 // pred_region
          %232 = vsyncadd [#allocation6], 0
          %s233 = sshll.u32 %s3, 4
          %s234 = int_to_ptr.hbm [resolvable:$true] %s233
          %s235 = sshll.u32 [#allocation7], 4
          %s236 = int_to_ptr.vmem [resolvable:$true] %s235
          %241 = dma.hbm_to_vmem [thread:$0]  %s234, 3072, %s236, [#allocation6], 64, 64, 4
        $region24: #{tpu_custom_call.1} parent=11 // pred_fallthru
          _
        // Predicated region
        $region25: #{tpu_custom_call.1} parent=11 // pred_check
          %p242 = pneg %p128
        $region26: #{tpu_custom_call.1} parent=11 // pred_check_branch
          %244 = sbr.rel (%p242) target = $region28
        $region27: #{tpu_custom_call.1} parent=11 // pred_region
          _
        $region28: #{tpu_custom_call.1} parent=11 // pred_fallthru
          _
        // Predicated region
        $region29: #{tpu_custom_call.1} parent=11 // pred_check
          %p245 = pneg %p149
        $region30: #{tpu_custom_call.1} parent=11 // pred_check_branch
          %247 = sbr.rel (%p245) target = $region32
        $region31: #{tpu_custom_call.1} parent=11 // pred_region
          %249 = vsyncadd [#allocation9], 0
          %s250 = sshll.u32 %s5, 4
          %s251 = int_to_ptr.hbm [resolvable:$true] %s250
          %s252 = sshll.u32 [#allocation8], 4
          %s253 = int_to_ptr.vmem [resolvable:$true] %s252
          %258 = dma.hbm_to_vmem [thread:$0]  %s251, 512, %s253, [#allocation9], 128, 128, 8
        $region32: #{tpu_custom_call.1} parent=11 // pred_fallthru
          _
        // Predicated region
        $region33: #{tpu_custom_call.1} parent=11 // pred_check
          %p259 = pneg %p170
        $region34: #{tpu_custom_call.1} parent=11 // pred_check_branch
          %261 = sbr.rel (%p259) target = $region36
        $region35: #{tpu_custom_call.1} parent=11 // pred_region
          %263 = vsyncadd [#allocation9], 0
          %s264 = sshll.u32 %s6, 4
          %s265 = int_to_ptr.hbm [resolvable:$true] %s264
          %s266 = sshll.u32 [#allocation10], 4
          %s267 = int_to_ptr.vmem [resolvable:$true] %s266
          %272 = dma.hbm_to_vmem [thread:$0]  %s265, 2048, %s267, [#allocation9], 128, 128, 8
        $region36: #{tpu_custom_call.1} parent=11 // pred_fallthru
          _
      $region12: #{tpu_custom_call.1} parent=5 // pred_fallthru
        _
      %p273 = scmp.lt.s32.totalorder %s18, 2
      // Predicated region
      $region37: #{tpu_custom_call.1} parent=5 // pred_check
        %p274 = pneg %p273
      $region38: #{tpu_custom_call.1} parent=5 // pred_check_branch
        %276 = sbr.rel (%p274) target = $region40
      $region39: #{tpu_custom_call.1} parent=5 // pred_region
        // Predicated region
        $region41: #{tpu_custom_call.1} parent=39 // pred_check
          %p277 = pneg %p38
        $region42: #{tpu_custom_call.1} parent=39 // pred_check_branch
          %279 = sbr.rel (%p277) target = $region44
        $region43: #{tpu_custom_call.1} parent=39 // pred_region
          %s280 = sand.u32 %s28, 1
          %s281 = scalar_lea.sflag [#allocation4], %s280
          %s282 = sand.u32 %s28, 1
          %s283 = smul.addr %s282, 64
          %s284 = scalar_lea.vmem [#allocation3], %s283
          %s285 = smul.u32 4, %s18
          %287 = vsyncadd %s281, 0
          %s288 = smul.addr %s285, 4
          %s289 = smul.addr %s288, 4
          %s290 = scalar_lea.hbm %s0, %s289
          %s291 = sshll.u32 %s290, 4
          %s292 = int_to_ptr.hbm [resolvable:$true] %s291
          %s293 = sshll.u32 %s284, 4
          %s294 = int_to_ptr.vmem [resolvable:$true] %s293
          %299 = dma.hbm_to_vmem [thread:$0]  %s292, 1024, %s294, %s281, 128, 128, 8
        $region44: #{tpu_custom_call.1} parent=39 // pred_fallthru
          _
      $region40: #{tpu_custom_call.1} parent=5 // pred_fallthru
        _
      %p300 = scmp.le.s32.totalorder 1, %s18
      %p301 = scmp.lt.s32.totalorder %s18, 3
      %p302 = pnand %p300, %p301
      %p303 = pneg %p302
      // Predicated region
      $region45: #{tpu_custom_call.1} parent=5 // pred_check
        _
      $region46: #{tpu_custom_call.1} parent=5 // pred_check_branch
        %305 = sbr.rel (%p302) target = $region48
      $region47: #{tpu_custom_call.1} parent=5 // pred_region
        %s306 = ssub.s32 %s18, 1
        %s307 = sand.u32 %s31, 1
        %s308 = scalar_lea.sflag [#allocation4], %s307
        %s309 = sand.u32 %s31, 1
        %s310 = smul.addr %s309, 64
        %s311 = scalar_lea.vmem [#allocation3], %s310
        // Predicated region
        $region49: #{tpu_custom_call.1} parent=47 // pred_check
          %p312 = pneg %p44
        $region50: #{tpu_custom_call.1} parent=47 // pred_check_branch
          %314 = sbr.rel (%p312) target = $region52
        $region51: #{tpu_custom_call.1} parent=47 // pred_region
          %316 = dma.done %s308, 1024
        $region52: #{tpu_custom_call.1} parent=47 // pred_fallthru
          _
        // Predicated region
        $region53: #{tpu_custom_call.1} parent=47 // pred_check
          %p317 = pneg %p65
        $region54: #{tpu_custom_call.1} parent=47 // pred_check_branch
          %319 = sbr.rel (%p317) target = $region56
        $region55: #{tpu_custom_call.1} parent=47 // pred_region
          %321 = dma.done [#allocation6], 1152
        $region56: #{tpu_custom_call.1} parent=47 // pred_fallthru
          _
        // Predicated region
        $region57: #{tpu_custom_call.1} parent=47 // pred_check
          %p322 = pneg %p107
        $region58: #{tpu_custom_call.1} parent=47 // pred_check_branch
          %324 = sbr.rel (%p322) target = $region60
        $region59: #{tpu_custom_call.1} parent=47 // pred_region
          %326 = dma.done [#allocation6], 3072
        $region60: #{tpu_custom_call.1} parent=47 // pred_fallthru
          _
        // Predicated region
        $region61: #{tpu_custom_call.1} parent=47 // pred_check
          %p327 = pneg %p149
        $region62: #{tpu_custom_call.1} parent=47 // pred_check_branch
          %329 = sbr.rel (%p327) target = $region64
        $region63: #{tpu_custom_call.1} parent=47 // pred_region
          %331 = dma.done [#allocation9], 512
        $region64: #{tpu_custom_call.1} parent=47 // pred_fallthru
          _
        // Predicated region
        $region65: #{tpu_custom_call.1} parent=47 // pred_check
          %p332 = pneg %p170
        $region66: #{tpu_custom_call.1} parent=47 // pred_check_branch
          %334 = sbr.rel (%p332) target = $region68
        $region67: #{tpu_custom_call.1} parent=47 // pred_region
          %336 = dma.done [#allocation9], 2048
        $region68: #{tpu_custom_call.1} parent=47 // pred_fallthru
          _
        %s337 = sand.u32 %s31, 1
        %s338 = scalar_lea.sflag [#allocation4], %s337
        %s339 = sand.u32 %s31, 1
        %s340 = smul.addr %s339, 64
        %s341 = scalar_lea.vmem [#allocation3], %s340
        %p342 = pneg %p44
        %p343 = pneg %p41
        %p344 = pneg %p65
        %p345 = pneg %p62
        %p346 = pneg %p86
        %p347 = pneg %p83
        %p348 = pneg %p107
        %p349 = pneg %p104
        %p350 = pneg %p128
        %p351 = pneg %p125
        %p352 = pneg %p149
        %p353 = pneg %p146
        %p354 = pneg %p170
        %p355 = pneg %p167
        %p356 = pneg %p196
        %p357 = pneg %p193
        %s358 = smul.u32 4, %s23
        %p359 = scmp.lt.s32.totalorder %s358, 7
        %s360 = scalar_select %p359, %s358, 7
        %s361 = smul.addr %s360, 8
        %s362 = scalar_lea.vmem %s7, %s361
        %s363 = smul.u32 4, %s23
        %s364 = smul.u32 4, %s23
        %p365 = scmp.lt.s32.totalorder %s364, 7
        %s366 = scalar_select %p365, %s364, 7
        %s367 = smul.addr %s366, 8
        %s368 = scalar_lea.vmem %s7, %s367
        %s369 = smul.u32 4, %s23
        %v371 = vld [vmem:[%s311] sm:$0xff]
        %v372 = vld [vmem:[%s311 + $0x8] sm:$0xff]
        %v373 = vld [vmem:[%s311 + $0x10] sm:$0xff]
        %v374 = vld [vmem:[%s311 + $0x18] sm:$0xff]
        %v375 = vld [vmem:[%s311 + $0x20] sm:$0xff]
        %v376 = vld [vmem:[%s311 + $0x28] sm:$0xff]
        %v377 = vld [vmem:[%s311 + $0x30] sm:$0xff]
        %v378 = vld [vmem:[%s311 + $0x38] sm:$0xff]
        %v379 = vld [vmem:[#allocation5] sm:$0xf]
        %v380 = vld [vmem:[#allocation5 + $0x4] sm:$0xf]
        %v381 = vld [vmem:[#allocation5 + $0x8] sm:$0xf]
        %v382 = vld [vmem:[#allocation5 + $0xc] sm:$0xf]
        %v383 = vld [vmem:[#allocation5 + $0x10] sm:$0xf]
        %v384 = vld [vmem:[#allocation5 + $0x14] sm:$0xf]
        %v385 = vld [vmem:[#allocation5 + $0x18] sm:$0xf]
        %v386 = vld [vmem:[#allocation5 + $0x1c] sm:$0xf]
        %v387 = vld [vmem:[#allocation5 + $0x20] sm:$0xf]
        %v388 = vld [vmem:[#allocation5 + $0x24] sm:$0xf]
        %v389 = vld [vmem:[#allocation5 + $0x28] sm:$0xf]
        %v390 = vld [vmem:[#allocation5 + $0x2c] sm:$0xf]
        %v391 = vld [vmem:[#allocation5 + $0x30] sm:$0xf]
        %v392 = vld [vmem:[#allocation5 + $0x34] sm:$0xf]
        %v393 = vld [vmem:[#allocation5 + $0x38] sm:$0xf]
        %v394 = vld [vmem:[#allocation5 + $0x3c] sm:$0xf]
        %v395 = vld [vmem:[#allocation5 + $0x40] sm:$0xf]
        %v396 = vld [vmem:[#allocation5 + $0x44] sm:$0xf]
        %v397 = vld [vmem:[%s2] sm:$0x1]
        %v399 = vperm.slane %v397, 0
        %v409 = vunpack.c.l.b16 %v371
        %v410 = vunpack.c.h.b16 %v371
        %v411 = vunpack.c.l.b16 %v372
        %v412 = vunpack.c.h.b16 %v372
        %v413 = vunpack.c.l.b16 %v373
        %v414 = vunpack.c.h.b16 %v373
        %v415 = vunpack.c.l.b16 %v374
        %v416 = vunpack.c.h.b16 %v374
        %v417 = vunpack.c.l.b16 %v375
        %v418 = vunpack.c.h.b16 %v375
        %v419 = vunpack.c.l.b16 %v376
        %v420 = vunpack.c.h.b16 %v376
        %v421 = vunpack.c.l.b16 %v377
        %v422 = vunpack.c.h.b16 %v377
        %v423 = vunpack.c.l.b16 %v378
        %v424 = vunpack.c.h.b16 %v378
        %v425 = vpack.c.b16 %v411, %v409
        %v426 = vpack.c.b16 %v412, %v410
        %v427 = vpack.c.b16 %v415, %v413
        %v428 = vpack.c.b16 %v416, %v414
        %v429 = vpack.c.b16 %v419, %v417
        %v430 = vpack.c.b16 %v420, %v418
        %v431 = vpack.c.b16 %v423, %v421
        %v432 = vpack.c.b16 %v424, %v422
        %v455 = vunpack.c.l.b16 %v379
        %v456 = vunpack.c.l.b16 %v380
        %v457 = vunpack.c.l.b16 %v381
        %v458 = vunpack.c.l.b16 %v382
        %v459 = vunpack.c.l.b16 %v383
        %v460 = vunpack.c.l.b16 %v384
        %v461 = vunpack.c.l.b16 %v385
        %v462 = vunpack.c.l.b16 %v386
        %v463 = vunpack.c.l.b16 %v387
        %v464 = vunpack.c.l.b16 %v388
        %v465 = vunpack.c.l.b16 %v389
        %v466 = vunpack.c.l.b16 %v390
        %v467 = vunpack.c.l.b16 %v391
        %v468 = vunpack.c.l.b16 %v392
        %v469 = vunpack.c.l.b16 %v393
        %v470 = vunpack.c.l.b16 %v394
        %v471 = vunpack.c.l.b16 %v395
        %v472 = vunpack.c.l.b16 %v396
        %v473 = vpack.c.b16 %v456, %v455
        %v474 = vpack.c.b16 %v458, %v457
        %v475 = vpack.c.b16 %v460, %v459
        %v476 = vpack.c.b16 %v462, %v461
        %v477 = vpack.c.b16 %v464, %v463
        %v478 = vpack.c.b16 %v466, %v465
        %v479 = vpack.c.b16 %v468, %v467
        %v480 = vpack.c.b16 %v470, %v469
        %v481 = vpack.c.b16 %v472, %v471
        %vm491 = vcmask 130048
        %v493 = vsel %vm491, %v426, 0
        %v496 = vsel %vm491, %v428, 0
        %v499 = vsel %vm491, %v430, 0
        %v502 = vsel %vm491, %v432, 0
        %504 = vmatpush.bf16.msra.mxu0 %v480
        %505 = vmatpush.bf16.msra.mxu0 %v479
        %506 = vmatpush.bf16.msra.mxu0 %v478
        %507 = vmatpush.bf16.msra.mxu0 %v477
        %508 = vmatpush.bf16.msra.mxu0 %v476
        %509 = vmatpush.bf16.msra.mxu0 %v475
        %510 = vmatpush.bf16.msra.mxu0 %v474
        %511 = vmatpush.bf16.msra.mxu0 %v473
        %512 = vmatmul.bf16.gmra.mxu0 %v425
        %v513 = vpop.f32.mrf.mxu0
        %v514 = vadd.f32 %v399, %v513
        %v515 = vpop.f32.mrf.mxu0
        %v516 = vadd.f32 %v399, %v515
        %517 = vmatmul.bf16.gmra.mxu0 %v427
        %v518 = vpop.f32.mrf.mxu0
        %v519 = vadd.f32 %v399, %v518
        %v520 = vpop.f32.mrf.mxu0
        %v521 = vadd.f32 %v399, %v520
        %522 = vmatmul.bf16.gmra.mxu0 %v429
        %v523 = vpop.f32.mrf.mxu0
        %v524 = vadd.f32 %v399, %v523
        %v525 = vpop.f32.mrf.mxu0
        %v526 = vadd.f32 %v399, %v525
        %527 = vmatmul.bf16.gmra.mxu0 %v431
        %v528 = vpop.f32.mrf.mxu0
        %v529 = vadd.f32 %v399, %v528
        %v530 = vpop.f32.mrf.mxu0
        %v531 = vadd.f32 %v399, %v530
        %532 = vdwg.mxu0
        %533 = vmatpush.bf16.msra.mxu0 0
        %534 = vmatpush.bf16.msra.mxu0 0
        %535 = vmatpush.bf16.msra.mxu0 0
        %536 = vmatpush.bf16.msra.mxu0 0
        %537 = vmatpush.bf16.msra.mxu0 0
        %538 = vmatpush.bf16.msra.mxu0 0
        %539 = vmatpush.bf16.msra.mxu0 0
        %540 = vmatpush.bf16.msra.mxu0 %v481
        %541 = vmatmul.bf16.gmra.mxu0 %v493
        %v542 = vpop.f32.mrf.mxu0
        %v543 = vadd.f32 %v514, %v542
        %v544 = vpop.f32.mrf.mxu0
        %v545 = vadd.f32 %v516, %v544
        %546 = vmatmul.bf16.gmra.mxu0 %v496
        %v547 = vpop.f32.mrf.mxu0
        %v548 = vadd.f32 %v519, %v547
        %v549 = vpop.f32.mrf.mxu0
        %v550 = vadd.f32 %v521, %v549
        %551 = vmatmul.bf16.gmra.mxu0 %v499
        %v552 = vpop.f32.mrf.mxu0
        %v553 = vadd.f32 %v524, %v552
        %v554 = vpop.f32.mrf.mxu0
        %v555 = vadd.f32 %v526, %v554
        %556 = vmatmul.bf16.gmra.mxu0 %v502
        %v557 = vpop.f32.mrf.mxu0
        %v558 = vadd.f32 %v529, %v557
        %v559 = vpop.f32.mrf.mxu0
        %v560 = vadd.f32 %v531, %v559
        %561 = vdwg.mxu0
        %v562 = vmax.f32 %v543, 0.0
        %v563 = vmax.f32 %v545, 0.0
        %v564 = vmax.f32 %v548, 0.0
        %v565 = vmax.f32 %v550, 0.0
        %v566 = vmax.f32 %v553, 0.0
        %v567 = vmax.f32 %v555, 0.0
        %v568 = vmax.f32 %v558, 0.0
        %v569 = vmax.f32 %v560, 0.0
        %v578 = vrot.slane %v562, 2
        %v579 = vrot.slane %v562, 4
        %v580 = vrot.slane %v562, 6
        %v581 = vrot.slane %v563, 2
        %v582 = vrot.slane %v563, 4
        %v583 = vrot.slane %v563, 6
        %v584 = vrot.slane %v564, 2
        %v585 = vrot.slane %v564, 4
        %v586 = vrot.slane %v564, 6
        %v587 = vrot.slane %v565, 2
        %v588 = vrot.slane %v565, 4
        %v589 = vrot.slane %v565, 6
        %v590 = vrot.slane %v566, 2
        %v591 = vrot.slane %v566, 4
        %v592 = vrot.slane %v566, 6
        %v593 = vrot.slane %v567, 2
        %v594 = vrot.slane %v567, 4
        %v595 = vrot.slane %v567, 6
        %v596 = vrot.slane %v568, 2
        %v597 = vrot.slane %v568, 4
        %v598 = vrot.slane %v568, 6
        %v599 = vrot.slane %v569, 2
        %v600 = vrot.slane %v569, 4
        %v601 = vrot.slane %v569, 6
        %v626 = vrot.slane %v562, 7
        %v627 = vrot.slane %v626, 2
        %v628 = vrot.slane %v578, 7
        %v629 = vrot.slane %v628, 2
        %v630 = vrot.slane %v579, 7
        %v631 = vrot.slane %v630, 2
        %v632 = vrot.slane %v580, 7
        %v633 = vrot.slane %v632, 2
        %v634 = vrot.slane %v563, 7
        %v635 = vrot.slane %v634, 2
        %v636 = vrot.slane %v581, 7
        %v637 = vrot.slane %v636, 2
        %v638 = vrot.slane %v582, 7
        %v639 = vrot.slane %v638, 2
        %v640 = vrot.slane %v583, 7
        %v641 = vrot.slane %v640, 2
        %v642 = vrot.slane %v564, 7
        %v643 = vrot.slane %v642, 2
        %v644 = vrot.slane %v584, 7
        %v645 = vrot.slane %v644, 2
        %v646 = vrot.slane %v585, 7
        %v647 = vrot.slane %v646, 2
        %v648 = vrot.slane %v586, 7
        %v649 = vrot.slane %v648, 2
        %v650 = vrot.slane %v565, 7
        %v651 = vrot.slane %v650, 2
        %v652 = vrot.slane %v587, 7
        %v653 = vrot.slane %v652, 2
        %v654 = vrot.slane %v588, 7
        %v655 = vrot.slane %v654, 2
        %v656 = vrot.slane %v589, 7
        %v657 = vrot.slane %v656, 2
        %v658 = vrot.slane %v566, 7
        %v659 = vrot.slane %v658, 2
        %v660 = vrot.slane %v590, 7
        %v661 = vrot.slane %v660, 2
        %v662 = vrot.slane %v591, 7
        %v663 = vrot.slane %v662, 2
        %v664 = vrot.slane %v592, 7
        %v665 = vrot.slane %v664, 2
        %v666 = vrot.slane %v567, 7
        %v667 = vrot.slane %v666, 2
        %v668 = vrot.slane %v593, 7
        %v669 = vrot.slane %v668, 2
        %v670 = vrot.slane %v594, 7
        %v671 = vrot.slane %v670, 2
        %v672 = vrot.slane %v595, 7
        %v673 = vrot.slane %v672, 2
        %v674 = vrot.slane %v568, 7
        %v675 = vrot.slane %v674, 2
        %v676 = vrot.slane %v596, 7
        %v677 = vrot.slane %v676, 2
        %v678 = vrot.slane %v597, 7
        %v679 = vrot.slane %v678, 2
        %v680 = vrot.slane %v598, 7
        %v681 = vrot.slane %v680, 2
        %v682 = vrot.slane %v569, 7
        %v683 = vrot.slane %v682, 2
        %v684 = vrot.slane %v599, 7
        %v685 = vrot.slane %v684, 2
        %v686 = vrot.slane %v600, 7
        %v687 = vrot.slane %v686, 2
        %v688 = vrot.slane %v601, 7
        %v689 = vrot.slane %v688, 2
        %v722 = vmax.f32 %v562, %v627
        %v723 = vmax.f32 %v578, %v629
        %v724 = vmax.f32 %v579, %v631
        %v725 = vmax.f32 %v580, %v633
        %v726 = vmax.f32 %v563, %v635
        %v727 = vmax.f32 %v581, %v637
        %v728 = vmax.f32 %v582, %v639
        %v729 = vmax.f32 %v583, %v641
        %v730 = vmax.f32 %v564, %v643
        %v731 = vmax.f32 %v584, %v645
        %v732 = vmax.f32 %v585, %v647
        %v733 = vmax.f32 %v586, %v649
        %v734 = vmax.f32 %v565, %v651
        %v735 = vmax.f32 %v587, %v653
        %v736 = vmax.f32 %v588, %v655
        %v737 = vmax.f32 %v589, %v657
        %v738 = vmax.f32 %v566, %v659
        %v739 = vmax.f32 %v590, %v661
        %v740 = vmax.f32 %v591, %v663
        %v741 = vmax.f32 %v592, %v665
        %v742 = vmax.f32 %v567, %v667
        %v743 = vmax.f32 %v593, %v669
        %v744 = vmax.f32 %v594, %v671
        %v745 = vmax.f32 %v595, %v673
        %v746 = vmax.f32 %v568, %v675
        %v747 = vmax.f32 %v596, %v677
        %v748 = vmax.f32 %v597, %v679
        %v749 = vmax.f32 %v598, %v681
        %v750 = vmax.f32 %v569, %v683
        %v751 = vmax.f32 %v599, %v685
        %v752 = vmax.f32 %v600, %v687
        %v753 = vmax.f32 %v601, %v689
        %v786 = vperm.slane %v722, 0
        %v787 = vperm.slane %v723, 0
        %v788 = vperm.slane %v724, 0
        %v789 = vperm.slane %v725, 0
        %v790 = vperm.slane %v726, 0
        %v791 = vperm.slane %v727, 0
        %v792 = vperm.slane %v728, 0
        %v793 = vperm.slane %v729, 0
        %v794 = vperm.slane %v730, 0
        %v795 = vperm.slane %v731, 0
        %v796 = vperm.slane %v732, 0
        %v797 = vperm.slane %v733, 0
        %v798 = vperm.slane %v734, 0
        %v799 = vperm.slane %v735, 0
        %v800 = vperm.slane %v736, 0
        %v801 = vperm.slane %v737, 0
        %v802 = vperm.slane %v738, 0
        %v803 = vperm.slane %v739, 0
        %v804 = vperm.slane %v740, 0
        %v805 = vperm.slane %v741, 0
        %v806 = vperm.slane %v742, 0
        %v807 = vperm.slane %v743, 0
        %v808 = vperm.slane %v744, 0
        %v809 = vperm.slane %v745, 0
        %v810 = vperm.slane %v746, 0
        %v811 = vperm.slane %v747, 0
        %v812 = vperm.slane %v748, 0
        %v813 = vperm.slane %v749, 0
        %v814 = vperm.slane %v750, 0
        %v815 = vperm.slane %v751, 0
        %v816 = vperm.slane %v752, 0
        %v817 = vperm.slane %v753, 0
        %vm818 = vcmask 1041409
        %v819 = vsel %vm818, %v787, %v786
        %vm820 = vcmask 1042434
        %v821 = vsel %vm820, %v788, %v819
        %vm822 = vcmask 1043459
        %v823 = vsel %vm822, %v789, %v821
        %vm824 = vcmask 1044484
        %v825 = vsel %vm824, %v790, %v823
        %vm826 = vcmask 1045509
        %v827 = vsel %vm826, %v791, %v825
        %vm828 = vcmask 1046534
        %v829 = vsel %vm828, %v792, %v827
        %vm830 = vcmask 1047559
        %v831 = vsel %vm830, %v793, %v829
        %v832 = vsel %vm818, %v795, %v794
        %v833 = vsel %vm820, %v796, %v832
        %v834 = vsel %vm822, %v797, %v833
        %v835 = vsel %vm824, %v798, %v834
        %v836 = vsel %vm826, %v799, %v835
        %v837 = vsel %vm828, %v800, %v836
        %v838 = vsel %vm830, %v801, %v837
        %v839 = vsel %vm818, %v803, %v802
        %v840 = vsel %vm820, %v804, %v839
        %v841 = vsel %vm822, %v805, %v840
        %v842 = vsel %vm824, %v806, %v841
        %v843 = vsel %vm826, %v807, %v842
        %v844 = vsel %vm828, %v808, %v843
        %v845 = vsel %vm830, %v809, %v844
        %v846 = vsel %vm818, %v811, %v810
        %v847 = vsel %vm820, %v812, %v846
        %v848 = vsel %vm822, %v813, %v847
        %v849 = vsel %vm824, %v814, %v848
        %v850 = vsel %vm826, %v815, %v849
        %v851 = vsel %vm828, %v816, %v850
        %v852 = vsel %vm830, %v817, %v851
        %857 = vrot.lane.b32.xlu0 %v831, 120
        %v858 = vpop.permute.xlu0 %857
        %859 = vrot.lane.b32.xlu0 %v838, 120
        %v860 = vpop.permute.xlu0 %859
        %861 = vrot.lane.b32.xlu0 %v845, 120
        %v862 = vpop.permute.xlu0 %861
        %863 = vrot.lane.b32.xlu0 %v852, 120
        %v864 = vpop.permute.xlu0 %863
        %v869 = vrot.slane %v858, 2
        %v870 = vrot.slane %v858, 4
        %v871 = vrot.slane %v858, 6
        %v872 = vrot.slane %v860, 2
        %v873 = vrot.slane %v860, 4
        %v874 = vrot.slane %v860, 6
        %v875 = vrot.slane %v862, 2
        %v876 = vrot.slane %v862, 4
        %v877 = vrot.slane %v862, 6
        %v878 = vrot.slane %v864, 2
        %v879 = vrot.slane %v864, 4
        %v880 = vrot.slane %v864, 6
        %v881 = vrot.slane %v858, 1
        %v882 = vrot.slane %v869, 1
        %v883 = vrot.slane %v870, 1
        %v884 = vrot.slane %v871, 1
        %v885 = vrot.slane %v860, 1
        %v886 = vrot.slane %v872, 1
        %v887 = vrot.slane %v873, 1
        %v888 = vrot.slane %v874, 1
        %v889 = vrot.slane %v862, 1
        %v890 = vrot.slane %v875, 1
        %v891 = vrot.slane %v876, 1
        %v892 = vrot.slane %v877, 1
        %v893 = vrot.slane %v864, 1
        %v894 = vrot.slane %v878, 1
        %v895 = vrot.slane %v879, 1
        %v896 = vrot.slane %v880, 1
        %v929 = vmax.f32 %v722, %v858
        %v930 = vmax.f32 %v723, %v881
        %v931 = vmax.f32 %v724, %v869
        %v932 = vmax.f32 %v725, %v882
        %v933 = vmax.f32 %v726, %v870
        %v934 = vmax.f32 %v727, %v883
        %v935 = vmax.f32 %v728, %v871
        %v936 = vmax.f32 %v729, %v884
        %v937 = vmax.f32 %v730, %v860
        %v938 = vmax.f32 %v731, %v885
        %v939 = vmax.f32 %v732, %v872
        %v940 = vmax.f32 %v733, %v886
        %v941 = vmax.f32 %v734, %v873
        %v942 = vmax.f32 %v735, %v887
        %v943 = vmax.f32 %v736, %v874
        %v944 = vmax.f32 %v737, %v888
        %v945 = vmax.f32 %v738, %v862
        %v946 = vmax.f32 %v739, %v889
        %v947 = vmax.f32 %v740, %v875
        %v948 = vmax.f32 %v741, %v890
        %v949 = vmax.f32 %v742, %v876
        %v950 = vmax.f32 %v743, %v891
        %v951 = vmax.f32 %v744, %v877
        %v952 = vmax.f32 %v745, %v892
        %v953 = vmax.f32 %v746, %v864
        %v954 = vmax.f32 %v747, %v893
        %v955 = vmax.f32 %v748, %v878
        %v956 = vmax.f32 %v749, %v894
        %v957 = vmax.f32 %v750, %v879
        %v958 = vmax.f32 %v751, %v895
        %v959 = vmax.f32 %v752, %v880
        %v960 = vmax.f32 %v753, %v896
        %vm961 = vcmask 1040384
        %vm962 = vsmask.f32 256
        %vm963 = vmand %vm961, %vm962
        %v964 = vld [vmem:[#allocation2] sm:$0x1]
        %v965 = vsel %vm963, 0, %v964
        %966 = vst [vmem:[#allocation2] sm:$0x1] %v965
        %v967 = vld [vmem:[#allocation2 + $0x8] sm:$0x1]
        %v968 = vsel %vm963, 0, %v967
        %969 = vst [vmem:[#allocation2 + $0x8] sm:$0x1] %v968
        %v970 = vld [vmem:[#allocation2 + $0x10] sm:$0x1]
        %v971 = vsel %vm963, 0, %v970
        %972 = vst [vmem:[#allocation2 + $0x10] sm:$0x1] %v971
        %v973 = vld [vmem:[#allocation2 + $0x18] sm:$0x1]
        %v974 = vsel %vm963, 0, %v973
        %975 = vst [vmem:[#allocation2 + $0x18] sm:$0x1] %v974
        %vm976 = vsmask.f32 7938
        %vm977 = vmand %vm961, %vm976
        %v978 = vld [vmem:[#allocation2 + $0x4] sm:$0x1]
        %v979 = vsel %vm977, 0, %v978
        %980 = vst [vmem:[#allocation2 + $0x4] sm:$0x1] %v979
        %v981 = vld [vmem:[#allocation2 + $0xc] sm:$0x1]
        %v982 = vsel %vm977, 0, %v981
        %983 = vst [vmem:[#allocation2 + $0xc] sm:$0x1] %v982
        %v984 = vld [vmem:[#allocation2 + $0x14] sm:$0x1]
        %v985 = vsel %vm977, 0, %v984
        %986 = vst [vmem:[#allocation2 + $0x14] sm:$0x1] %v985
        %v987 = vld [vmem:[#allocation2 + $0x1c] sm:$0x1]
        %v988 = vsel %vm977, 0, %v987
        %989 = vst [vmem:[#allocation2 + $0x1c] sm:$0x1] %v988
        %v990 = vpack.c.bf16 %v929, %v929
        %v991 = vpack.c.bf16 %v930, %v930
        %v992 = vpack.c.bf16 %v931, %v931
        %v993 = vpack.c.bf16 %v932, %v932
        %v994 = vpack.c.bf16 %v933, %v933
        %v995 = vpack.c.bf16 %v934, %v934
        %v996 = vpack.c.bf16 %v935, %v935
        %v997 = vpack.c.bf16 %v936, %v936
        %v998 = vpack.c.bf16 %v937, %v937
        %v999 = vpack.c.bf16 %v938, %v938
        %v1000 = vpack.c.bf16 %v939, %v939
        %v1001 = vpack.c.bf16 %v940, %v940
        %v1002 = vpack.c.bf16 %v941, %v941
        %v1003 = vpack.c.bf16 %v942, %v942
        %v1004 = vpack.c.bf16 %v943, %v943
        %v1005 = vpack.c.bf16 %v944, %v944
        %v1006 = vpack.c.bf16 %v945, %v945
        %v1007 = vpack.c.bf16 %v946, %v946
        %v1008 = vpack.c.bf16 %v947, %v947
        %v1009 = vpack.c.bf16 %v948, %v948
        %v1010 = vpack.c.bf16 %v949, %v949
        %v1011 = vpack.c.bf16 %v950, %v950
        %v1012 = vpack.c.bf16 %v951, %v951
        %v1013 = vpack.c.bf16 %v952, %v952
        %v1014 = vpack.c.bf16 %v953, %v953
        %v1015 = vpack.c.bf16 %v954, %v954
        %v1016 = vpack.c.bf16 %v955, %v955
        %v1017 = vpack.c.bf16 %v956, %v956
        %v1018 = vpack.c.bf16 %v957, %v957
        %v1019 = vpack.c.bf16 %v958, %v958
        %v1020 = vpack.c.bf16 %v959, %v959
        %v1021 = vpack.c.bf16 %v960, %v960
        %v1054 = vunpack.c.l.b16 %v990
        %v1055 = vunpack.c.l.b16 %v991
        %v1056 = vunpack.c.l.b16 %v992
        %v1057 = vunpack.c.l.b16 %v993
        %v1058 = vunpack.c.l.b16 %v994
        %v1059 = vunpack.c.l.b16 %v995
        %v1060 = vunpack.c.l.b16 %v996
        %v1061 = vunpack.c.l.b16 %v997
        %v1062 = vunpack.c.l.b16 %v998
        %v1063 = vunpack.c.l.b16 %v999
        %v1064 = vunpack.c.l.b16 %v1000
        %v1065 = vunpack.c.l.b16 %v1001
        %v1066 = vunpack.c.l.b16 %v1002
        %v1067 = vunpack.c.l.b16 %v1003
        %v1068 = vunpack.c.l.b16 %v1004
        %v1069 = vunpack.c.l.b16 %v1005
        %v1070 = vunpack.c.l.b16 %v1006
        %v1071 = vunpack.c.l.b16 %v1007
        %v1072 = vunpack.c.l.b16 %v1008
        %v1073 = vunpack.c.l.b16 %v1009
        %v1074 = vunpack.c.l.b16 %v1010
        %v1075 = vunpack.c.l.b16 %v1011
        %v1076 = vunpack.c.l.b16 %v1012
        %v1077 = vunpack.c.l.b16 %v1013
        %v1078 = vunpack.c.l.b16 %v1014
        %v1079 = vunpack.c.l.b16 %v1015
        %v1080 = vunpack.c.l.b16 %v1016
        %v1081 = vunpack.c.l.b16 %v1017
        %v1082 = vunpack.c.l.b16 %v1018
        %v1083 = vunpack.c.l.b16 %v1019
        %v1084 = vunpack.c.l.b16 %v1020
        %v1085 = vunpack.c.l.b16 %v1021
        %v1086 = vrot.slane %v1054, 7
        %v1087 = vrot.slane %v1055, 6
        %v1088 = vsel %vm820, %v1087, %v1086
        %v1089 = vrot.slane %v1056, 5
        %v1090 = vsel %vm822, %v1089, %v1088
        %v1091 = vrot.slane %v1057, 4
        %v1092 = vsel %vm824, %v1091, %v1090
        %v1093 = vrot.slane %v1058, 3
        %v1094 = vsel %vm826, %v1093, %v1092
        %v1095 = vrot.slane %v1059, 2
        %v1096 = vsel %vm828, %v1095, %v1094
        %v1097 = vrot.slane %v1060, 1
        %v1098 = vsel %vm830, %v1097, %v1096
        %v1099 = vrot.slane %v1062, 7
        %v1100 = vrot.slane %v1063, 6
        %v1101 = vsel %vm820, %v1100, %v1099
        %v1102 = vrot.slane %v1064, 5
        %v1103 = vsel %vm822, %v1102, %v1101
        %v1104 = vrot.slane %v1065, 4
        %v1105 = vsel %vm824, %v1104, %v1103
        %v1106 = vrot.slane %v1066, 3
        %v1107 = vsel %vm826, %v1106, %v1105
        %v1108 = vrot.slane %v1067, 2
        %v1109 = vsel %vm828, %v1108, %v1107
        %v1110 = vrot.slane %v1068, 1
        %v1111 = vsel %vm830, %v1110, %v1109
        %v1112 = vrot.slane %v1070, 7
        %v1113 = vrot.slane %v1071, 6
        %v1114 = vsel %vm820, %v1113, %v1112
        %v1115 = vrot.slane %v1072, 5
        %v1116 = vsel %vm822, %v1115, %v1114
        %v1117 = vrot.slane %v1073, 4
        %v1118 = vsel %vm824, %v1117, %v1116
        %v1119 = vrot.slane %v1074, 3
        %v1120 = vsel %vm826, %v1119, %v1118
        %v1121 = vrot.slane %v1075, 2
        %v1122 = vsel %vm828, %v1121, %v1120
        %v1123 = vrot.slane %v1076, 1
        %v1124 = vsel %vm830, %v1123, %v1122
        %v1125 = vrot.slane %v1078, 7
        %v1126 = vrot.slane %v1079, 6
        %v1127 = vsel %vm820, %v1126, %v1125
        %v1128 = vrot.slane %v1080, 5
        %v1129 = vsel %vm822, %v1128, %v1127
        %v1130 = vrot.slane %v1081, 4
        %v1131 = vsel %vm824, %v1130, %v1129
        %v1132 = vrot.slane %v1082, 3
        %v1133 = vsel %vm826, %v1132, %v1131
        %v1134 = vrot.slane %v1083, 2
        %v1135 = vsel %vm828, %v1134, %v1133
        %v1136 = vrot.slane %v1084, 1
        %v1137 = vsel %vm830, %v1136, %v1135
        %v1138 = vpack.c.b16 %v1098, %v1098
        %v1139 = vpack.c.b16 %v1061, %v1061
        %v1140 = vpack.c.b16 %v1111, %v1111
        %v1141 = vpack.c.b16 %v1069, %v1069
        %v1142 = vpack.c.b16 %v1124, %v1124
        %v1143 = vpack.c.b16 %v1077, %v1077
        %v1144 = vpack.c.b16 %v1137, %v1137
        %v1145 = vpack.c.b16 %v1085, %v1085
        %vm1154 = vcmask 1043456
        %vm1155 = vmand %vm1154, %vm976
        %v1156 = vld [vmem:[#allocation2] sm:$0xf]
        %v1157 = vsel %vm1155, %v1138, %v1156
        %1158 = vst [vmem:[#allocation2] sm:$0xf] %v1157
        %v1159 = vld [vmem:[#allocation2 + $0x4] sm:$0x1]
        %v1160 = vsel %vm963, %v1139, %v1159
        %1161 = vst [vmem:[#allocation2 + $0x4] sm:$0x1] %v1160
        %v1162 = vld [vmem:[#allocation2 + $0x8] sm:$0xf]
        %v1163 = vsel %vm1155, %v1140, %v1162
        %1164 = vst [vmem:[#allocation2 + $0x8] sm:$0xf] %v1163
        %v1165 = vld [vmem:[#allocation2 + $0xc] sm:$0x1]
        %v1166 = vsel %vm963, %v1141, %v1165
        %1167 = vst [vmem:[#allocation2 + $0xc] sm:$0x1] %v1166
        %v1168 = vld [vmem:[#allocation2 + $0x10] sm:$0xf]
        %v1169 = vsel %vm1155, %v1142, %v1168
        %1170 = vst [vmem:[#allocation2 + $0x10] sm:$0xf] %v1169
        %v1171 = vld [vmem:[#allocation2 + $0x14] sm:$0x1]
        %v1172 = vsel %vm963, %v1143, %v1171
        %1173 = vst [vmem:[#allocation2 + $0x14] sm:$0x1] %v1172
        %v1174 = vld [vmem:[#allocation2 + $0x18] sm:$0xf]
        %v1175 = vsel %vm1155, %v1144, %v1174
        %1176 = vst [vmem:[#allocation2 + $0x18] sm:$0xf] %v1175
        %v1177 = vld [vmem:[#allocation2 + $0x1c] sm:$0x1]
        %v1178 = vsel %vm963, %v1145, %v1177
        %1179 = vst [vmem:[#allocation2 + $0x1c] sm:$0x1] %v1178
        %v1180 = vld [vmem:[#allocation2] sm:$0xf]
        %v1181 = vld [vmem:[#allocation2 + $0x8] sm:$0xf]
        %v1182 = vld [vmem:[#allocation2 + $0x10] sm:$0xf]
        %v1183 = vld [vmem:[#allocation2 + $0x18] sm:$0xf]
        %v1184 = vld [vmem:[#allocation2 + $0x4] sm:$0x1]
        %v1185 = vld [vmem:[#allocation2 + $0xc] sm:$0x1]
        %v1186 = vld [vmem:[#allocation2 + $0x14] sm:$0x1]
        %v1187 = vld [vmem:[#allocation2 + $0x1c] sm:$0x1]
        %v1188 = vld [vmem:[#allocation2] sm:$0xe]
        %v1189 = vld [vmem:[#allocation2 + $0x8] sm:$0xe]
        %v1190 = vld [vmem:[#allocation2 + $0x10] sm:$0xe]
        %v1191 = vld [vmem:[#allocation2 + $0x18] sm:$0xe]
        %v1200 = vunpack.c.l.b16 %v1180
        %v1201 = vunpack.c.l.b16 %v1184
        %v1202 = vunpack.c.l.b16 %v1181
        %v1203 = vunpack.c.l.b16 %v1185
        %v1204 = vunpack.c.l.b16 %v1182
        %v1205 = vunpack.c.l.b16 %v1186
        %v1206 = vunpack.c.l.b16 %v1183
        %v1207 = vunpack.c.l.b16 %v1187
        %v1208 = vpack.c.b16 %v1201, %v1200
        %v1209 = vpack.c.b16 %v1203, %v1202
        %v1210 = vpack.c.b16 %v1205, %v1204
        %v1211 = vpack.c.b16 %v1207, %v1206
        %v1213 = vshrl.u32 %v1208, 16
        %v1215 = vshll.u32 %v1208, 16
        %v1217 = vrot.slane %v1215, 1
        %v1218 = vor.u32 %v1213, %v1217
        %v1220 = vshrl.u32 %v1209, 16
        %v1222 = vshll.u32 %v1209, 16
        %v1224 = vrot.slane %v1222, 1
        %v1225 = vor.u32 %v1220, %v1224
        %v1227 = vshrl.u32 %v1210, 16
        %v1229 = vshll.u32 %v1210, 16
        %v1231 = vrot.slane %v1229, 1
        %v1232 = vor.u32 %v1227, %v1231
        %v1234 = vshrl.u32 %v1211, 16
        %v1236 = vshll.u32 %v1211, 16
        %v1238 = vrot.slane %v1236, 1
        %v1239 = vor.u32 %v1234, %v1238
        %v1244 = vunpack.c.l.b16 %v1188
        %v1245 = vunpack.c.l.b16 %v1189
        %v1246 = vunpack.c.l.b16 %v1190
        %v1247 = vunpack.c.l.b16 %v1191
        %v1248 = vpack.c.b16 %v1201, %v1244
        %v1249 = vpack.c.b16 %v1203, %v1245
        %v1250 = vpack.c.b16 %v1205, %v1246
        %v1251 = vpack.c.b16 %v1207, %v1247
        %v1252 = vrot.slane %v1248, 1
        %v1253 = vrot.slane %v1249, 1
        %v1254 = vrot.slane %v1250, 1
        %v1255 = vrot.slane %v1251, 1
        %v1256 = vunpack.c.l.b16 %v1218
        %v1257 = vunpack.c.l.b16 %v1252
        %v1258 = vunpack.c.l.b16 %v1225
        %v1259 = vunpack.c.l.b16 %v1253
        %v1260 = vunpack.c.l.b16 %v1232
        %v1261 = vunpack.c.l.b16 %v1254
        %v1262 = vunpack.c.l.b16 %v1239
        %v1263 = vunpack.c.l.b16 %v1255
        %v1264 = vld [vmem:[#allocation7] sm:$0xf]
        %v1265 = vld [vmem:[#allocation7 + $0x4] sm:$0xf]
        %v1266 = vld [vmem:[#allocation7 + $0x8] sm:$0xf]
        %v1267 = vld [vmem:[#allocation7 + $0xc] sm:$0xf]
        %v1268 = vld [vmem:[#allocation7 + $0x10] sm:$0xf]
        %v1269 = vld [vmem:[#allocation7 + $0x14] sm:$0xf]
        %v1270 = vld [vmem:[#allocation7 + $0x18] sm:$0xf]
        %v1271 = vld [vmem:[#allocation7 + $0x1c] sm:$0xf]
        %v1272 = vld [vmem:[#allocation7 + $0x20] sm:$0xf]
        %v1273 = vld [vmem:[#allocation7 + $0x24] sm:$0xf]
        %v1274 = vld [vmem:[#allocation7 + $0x28] sm:$0xf]
        %v1275 = vld [vmem:[#allocation7 + $0x2c] sm:$0xf]
        %v1276 = vld [vmem:[#allocation7 + $0x30] sm:$0xf]
        %v1277 = vld [vmem:[#allocation7 + $0x34] sm:$0xf]
        %v1278 = vld [vmem:[#allocation7 + $0x38] sm:$0xf]
        %v1279 = vld [vmem:[#allocation7 + $0x3c] sm:$0xf]
        %v1280 = vld [vmem:[#allocation7 + $0x40] sm:$0xf]
        %v1281 = vld [vmem:[#allocation7 + $0x44] sm:$0xf]
        %v1282 = vld [vmem:[#allocation7 + $0x48] sm:$0xf]
        %v1283 = vld [vmem:[#allocation7 + $0x4c] sm:$0xf]
        %v1284 = vld [vmem:[#allocation7 + $0x50] sm:$0xf]
        %v1285 = vld [vmem:[#allocation7 + $0x54] sm:$0xf]
        %v1286 = vld [vmem:[#allocation7 + $0x58] sm:$0xf]
        %v1287 = vld [vmem:[#allocation7 + $0x5c] sm:$0xf]
        %v1288 = vld [vmem:[#allocation7 + $0x60] sm:$0xf]
        %v1289 = vld [vmem:[#allocation7 + $0x64] sm:$0xf]
        %v1290 = vld [vmem:[#allocation7 + $0x68] sm:$0xf]
        %v1291 = vld [vmem:[#allocation7 + $0x6c] sm:$0xf]
        %v1292 = vld [vmem:[#allocation7 + $0x70] sm:$0xf]
        %v1293 = vld [vmem:[#allocation7 + $0x74] sm:$0xf]
        %v1294 = vld [vmem:[#allocation7 + $0x78] sm:$0xf]
        %v1295 = vld [vmem:[#allocation7 + $0x7c] sm:$0xf]
        %v1296 = vld [vmem:[#allocation7 + $0x80] sm:$0xf]
        %v1297 = vld [vmem:[#allocation7 + $0x84] sm:$0xf]
        %v1298 = vld [vmem:[#allocation7 + $0x88] sm:$0xf]
        %v1299 = vld [vmem:[#allocation7 + $0x8c] sm:$0xf]
        %v1300 = vld [vmem:[#allocation7 + $0x90] sm:$0xf]
        %v1301 = vld [vmem:[#allocation7 + $0x94] sm:$0xf]
        %v1302 = vld [vmem:[#allocation7 + $0x98] sm:$0xf]
        %v1303 = vld [vmem:[#allocation7 + $0x9c] sm:$0xf]
        %v1304 = vld [vmem:[#allocation7 + $0xa0] sm:$0xf]
        %v1305 = vld [vmem:[#allocation7 + $0xa4] sm:$0xf]
        %v1306 = vld [vmem:[#allocation7 + $0xa8] sm:$0xf]
        %v1307 = vld [vmem:[#allocation7 + $0xac] sm:$0xf]
        %v1308 = vld [vmem:[#allocation7 + $0xb0] sm:$0xf]
        %v1309 = vld [vmem:[#allocation7 + $0xb4] sm:$0xf]
        %v1310 = vld [vmem:[#allocation7 + $0xb8] sm:$0xf]
        %v1311 = vld [vmem:[#allocation7 + $0xbc] sm:$0xf]
        %v1312 = vld [vmem:[%s4] sm:$0x1]
        %v1314 = vperm.slane %v1312, 0
        %v1316 = vpack.c.b16 %v1202, %v1200
        %v1317 = vpack.c.b16 %v1258, %v1256
        %v1318 = vpack.c.b16 %v1259, %v1257
        %v1319 = vpack.c.b16 %v1206, %v1204
        %v1320 = vpack.c.b16 %v1262, %v1260
        %v1321 = vpack.c.b16 %v1263, %v1261
        %v1376 = vunpack.c.l.b16 %v1264
        %v1377 = vunpack.c.l.b16 %v1265
        %v1378 = vunpack.c.l.b16 %v1266
        %v1379 = vunpack.c.l.b16 %v1267
        %v1380 = vunpack.c.l.b16 %v1268
        %v1381 = vunpack.c.l.b16 %v1269
        %v1382 = vunpack.c.l.b16 %v1270
        %v1383 = vunpack.c.l.b16 %v1271
        %v1384 = vunpack.c.l.b16 %v1272
        %v1385 = vunpack.c.l.b16 %v1273
        %v1386 = vunpack.c.l.b16 %v1274
        %v1387 = vunpack.c.l.b16 %v1275
        %v1388 = vunpack.c.l.b16 %v1276
        %v1389 = vunpack.c.l.b16 %v1277
        %v1390 = vunpack.c.l.b16 %v1278
        %v1391 = vunpack.c.l.b16 %v1279
        %v1392 = vunpack.c.l.b16 %v1280
        %v1393 = vunpack.c.l.b16 %v1281
        %v1394 = vunpack.c.l.b16 %v1282
        %v1395 = vunpack.c.l.b16 %v1283
        %v1396 = vunpack.c.l.b16 %v1284
        %v1397 = vunpack.c.l.b16 %v1285
        %v1398 = vunpack.c.l.b16 %v1286
        %v1399 = vunpack.c.l.b16 %v1287
        %v1400 = vunpack.c.l.b16 %v1288
        %v1401 = vunpack.c.l.b16 %v1289
        %v1402 = vunpack.c.l.b16 %v1290
        %v1403 = vunpack.c.l.b16 %v1291
        %v1404 = vunpack.c.l.b16 %v1292
        %v1405 = vunpack.c.l.b16 %v1293
        %v1406 = vunpack.c.l.b16 %v1294
        %v1407 = vunpack.c.l.b16 %v1295
        %v1408 = vunpack.c.l.b16 %v1296
        %v1409 = vunpack.c.l.b16 %v1297
        %v1410 = vunpack.c.l.b16 %v1298
        %v1411 = vunpack.c.l.b16 %v1299
        %v1412 = vunpack.c.l.b16 %v1300
        %v1413 = vunpack.c.l.b16 %v1301
        %v1414 = vunpack.c.l.b16 %v1302
        %v1415 = vunpack.c.l.b16 %v1303
        %v1416 = vunpack.c.l.b16 %v1304
        %v1417 = vunpack.c.l.b16 %v1305
        %v1418 = vunpack.c.l.b16 %v1306
        %v1419 = vunpack.c.l.b16 %v1307
        %v1420 = vunpack.c.l.b16 %v1308
        %v1421 = vunpack.c.l.b16 %v1309
        %v1422 = vunpack.c.l.b16 %v1310
        %v1423 = vunpack.c.l.b16 %v1311
        %v1424 = vpack.c.b16 %v1377, %v1376
        %v1425 = vpack.c.b16 %v1379, %v1378
        %v1426 = vpack.c.b16 %v1381, %v1380
        %v1427 = vpack.c.b16 %v1383, %v1382
        %v1428 = vpack.c.b16 %v1385, %v1384
        %v1429 = vpack.c.b16 %v1387, %v1386
        %v1430 = vpack.c.b16 %v1389, %v1388
        %v1431 = vpack.c.b16 %v1391, %v1390
        %v1432 = vpack.c.b16 %v1393, %v1392
        %v1433 = vpack.c.b16 %v1395, %v1394
        %v1434 = vpack.c.b16 %v1397, %v1396
        %v1435 = vpack.c.b16 %v1399, %v1398
        %v1436 = vpack.c.b16 %v1401, %v1400
        %v1437 = vpack.c.b16 %v1403, %v1402
        %v1438 = vpack.c.b16 %v1405, %v1404
        %v1439 = vpack.c.b16 %v1407, %v1406
        %v1440 = vpack.c.b16 %v1409, %v1408
        %v1441 = vpack.c.b16 %v1411, %v1410
        %v1442 = vpack.c.b16 %v1413, %v1412
        %v1443 = vpack.c.b16 %v1415, %v1414
        %v1444 = vpack.c.b16 %v1417, %v1416
        %v1445 = vpack.c.b16 %v1419, %v1418
        %v1446 = vpack.c.b16 %v1421, %v1420
        %v1447 = vpack.c.b16 %v1423, %v1422
        %1472 = vmatpush.bf16.msra.mxu0 %v1431
        %1473 = vmatpush.bf16.msra.mxu0 %v1430
        %1474 = vmatpush.bf16.msra.mxu0 %v1429
        %1475 = vmatpush.bf16.msra.mxu0 %v1428
        %1476 = vmatpush.bf16.msra.mxu0 %v1427
        %1477 = vmatpush.bf16.msra.mxu0 %v1426
        %1478 = vmatpush.bf16.msra.mxu0 %v1425
        %1479 = vmatpush.bf16.msra.mxu0 %v1424
        %1480 = vmatmul.bf16.gmra.mxu0 %v1316
        %v1481 = vpop.f32.mrf.mxu0
        %v1482 = vadd.f32 %v1314, %v1481
        %v1483 = vpop.f32.mrf.mxu0
        %v1484 = vadd.f32 %v1314, %v1483
        %1485 = vmatmul.bf16.gmra.mxu0 %v1319
        %v1486 = vpop.f32.mrf.mxu0
        %v1487 = vadd.f32 %v1314, %v1486
        %v1488 = vpop.f32.mrf.mxu0
        %v1489 = vadd.f32 %v1314, %v1488
        %1490 = vdwg.mxu0
        %1491 = vmatpush.bf16.msra.mxu0 %v1439
        %1492 = vmatpush.bf16.msra.mxu0 %v1438
        %1493 = vmatpush.bf16.msra.mxu0 %v1437
        %1494 = vmatpush.bf16.msra.mxu0 %v1436
        %1495 = vmatpush.bf16.msra.mxu0 %v1435
        %1496 = vmatpush.bf16.msra.mxu0 %v1434
        %1497 = vmatpush.bf16.msra.mxu0 %v1433
        %1498 = vmatpush.bf16.msra.mxu0 %v1432
        %1499 = vmatmul.bf16.gmra.mxu0 %v1317
        %v1500 = vpop.f32.mrf.mxu0
        %v1501 = vadd.f32 %v1482, %v1500
        %v1502 = vpop.f32.mrf.mxu0
        %v1503 = vadd.f32 %v1484, %v1502
        %1504 = vmatmul.bf16.gmra.mxu0 %v1320
        %v1505 = vpop.f32.mrf.mxu0
        %v1506 = vadd.f32 %v1487, %v1505
        %v1507 = vpop.f32.mrf.mxu0
        %v1508 = vadd.f32 %v1489, %v1507
        %1509 = vdwg.mxu0
        %1510 = vmatpush.bf16.msra.mxu0 %v1447
        %1511 = vmatpush.bf16.msra.mxu0 %v1446
        %1512 = vmatpush.bf16.msra.mxu0 %v1445
        %1513 = vmatpush.bf16.msra.mxu0 %v1444
        %1514 = vmatpush.bf16.msra.mxu0 %v1443
        %1515 = vmatpush.bf16.msra.mxu0 %v1442
        %1516 = vmatpush.bf16.msra.mxu0 %v1441
        %1517 = vmatpush.bf16.msra.mxu0 %v1440
        %1518 = vmatmul.bf16.gmra.mxu0 %v1318
        %v1519 = vpop.f32.mrf.mxu0
        %v1520 = vadd.f32 %v1501, %v1519
        %v1521 = vpop.f32.mrf.mxu0
        %v1522 = vadd.f32 %v1503, %v1521
        %1523 = vmatmul.bf16.gmra.mxu0 %v1321
        %v1524 = vpop.f32.mrf.mxu0
        %v1525 = vadd.f32 %v1506, %v1524
        %v1526 = vpop.f32.mrf.mxu0
        %v1527 = vadd.f32 %v1508, %v1526
        %1528 = vdwg.mxu0
        %v1529 = vmax.f32 %v1520, 0.0
        %v1530 = vmax.f32 %v1522, 0.0
        %v1531 = vmax.f32 %v1525, 0.0
        %v1532 = vmax.f32 %v1527, 0.0
        %v1533 = vld [vmem:[#allocation8] sm:$0xff]
        %v1534 = vld [vmem:[#allocation8 + $0x8] sm:$0xff]
        %v1535 = vld [vmem:[#allocation8 + $0x10] sm:$0xff]
        %v1536 = vld [vmem:[#allocation8 + $0x18] sm:$0xf]
        %vm1537 = vcmask 261120
        %v1539 = vsel %vm1537, %v1533, 0
        %v1542 = vsel %vm1537, %v1534, 0
        %v1545 = vsel %vm1537, %v1535, 0
        %v1548 = vsel %vm1537, %v1536, 0
        %1550 = vmatpush.msra.mxu0 0.0
        %1551 = vmatpush.msra.mxu0 0.0
        %1552 = vmatpush.msra.mxu0 0.0
        %1553 = vmatpush.msra.mxu0 0.0
        %1554 = vmatpush.msra.mxu0 0.0
        %1555 = vmatpush.msra.mxu0 0.0
        %1556 = vmatpush.msra.mxu0 0.0
        %1557 = vmatpush.msra.mxu0 0.0
        %1558 = vmatpush.msra.mxu0 0.0
        %1559 = vmatpush.msra.mxu0 0.0
        %1560 = vmatpush.msra.mxu0 0.0
        %1561 = vmatpush.msra.mxu0 0.0
        %1562 = vmatpush.msra.mxu0 %v1532
        %1563 = vmatpush.msra.mxu0 %v1531
        %1564 = vmatpush.msra.mxu0 %v1530
        %1565 = vmatpush.msra.mxu0 %v1529
        %1566 = vmatmul.f32.gmra.mxu0 %v1539
        %v1567 = vpop.f32.mrf.mxu0
        %v1568 = vadd.f32 0.0, %v1567
        %1569 = vmatmul.f32.gmra.mxu0 %v1542
        %v1570 = vpop.f32.mrf.mxu0
        %v1571 = vadd.f32 0.0, %v1570
        %1572 = vmatmul.f32.gmra.mxu0 %v1545
        %v1573 = vpop.f32.mrf.mxu0
        %v1574 = vadd.f32 0.0, %v1573
        %1575 = vmatmul.f32.gmra.mxu0 %v1548
        %v1576 = vpop.f32.mrf.mxu0
        %v1577 = vadd.f32 0.0, %v1576
        %1578 = vdwg.mxu0
        %v1579 = vld [vmem:[#allocation10] sm:$0xff]
        %v1580 = vld [vmem:[#allocation10 + $0x8] sm:$0xff]
        %v1581 = vld [vmem:[#allocation10 + $0x10] sm:$0xff]
        %v1582 = vld [vmem:[#allocation10 + $0x18] sm:$0xff]
        %v1583 = vld [vmem:[#allocation10 + $0x20] sm:$0xff]
        %v1584 = vld [vmem:[#allocation10 + $0x28] sm:$0xff]
        %v1585 = vld [vmem:[#allocation10 + $0x30] sm:$0xff]
        %v1586 = vld [vmem:[#allocation10 + $0x38] sm:$0xff]
        %v1587 = vld [vmem:[#allocation10 + $0x40] sm:$0xff]
        %v1588 = vld [vmem:[#allocation10 + $0x48] sm:$0xff]
        %v1589 = vld [vmem:[#allocation10 + $0x50] sm:$0xff]
        %v1590 = vld [vmem:[#allocation10 + $0x58] sm:$0xff]
        %v1591 = vld [vmem:[#allocation10 + $0x60] sm:$0xff]
        %v1592 = vld [vmem:[#allocation10 + $0x68] sm:$0xff]
        %v1593 = vld [vmem:[#allocation10 + $0x70] sm:$0xff]
        %v1594 = vld [vmem:[#allocation10 + $0x78] sm:$0xff]
        %1595 = vmatpush.msra.mxu0 %v1594
        %1596 = vmatpush.msra.mxu0 %v1593
        %1597 = vmatpush.msra.mxu0 %v1592
        %1598 = vmatpush.msra.mxu0 %v1591
        %1599 = vmatpush.msra.mxu0 %v1590
        %1600 = vmatpush.msra.mxu0 %v1589
        %1601 = vmatpush.msra.mxu0 %v1588
        %1602 = vmatpush.msra.mxu0 %v1587
        %1603 = vmatpush.msra.mxu0 %v1586
        %1604 = vmatpush.msra.mxu0 %v1585
        %1605 = vmatpush.msra.mxu0 %v1584
        %1606 = vmatpush.msra.mxu0 %v1583
        %1607 = vmatpush.msra.mxu0 %v1582
        %1608 = vmatpush.msra.mxu0 %v1581
        %1609 = vmatpush.msra.mxu0 %v1580
        %1610 = vmatpush.msra.mxu0 %v1579
        %1611 = vmatmul.f32.gmra.mxu0 %v1568
        %v1612 = vpop.f32.mrf.mxu0
        %v1613 = vadd.f32 0.0, %v1612
        %1614 = vmatmul.f32.gmra.mxu0 %v1571
        %v1615 = vpop.f32.mrf.mxu0
        %v1616 = vadd.f32 0.0, %v1615
        %1617 = vmatmul.f32.gmra.mxu0 %v1574
        %v1618 = vpop.f32.mrf.mxu0
        %v1619 = vadd.f32 0.0, %v1618
        %1620 = vmatmul.f32.gmra.mxu0 %v1577
        %v1621 = vpop.f32.mrf.mxu0
        %v1622 = vadd.f32 0.0, %v1621
        %1623 = vdwg.mxu0
        %v1628 = vrot.slane %v1613, 1
        %v1629 = vrot.slane %v1613, 2
        %v1630 = vrot.slane %v1613, 3
        %v1631 = vrot.slane %v1613, 4
        %v1632 = vrot.slane %v1613, 5
        %v1633 = vrot.slane %v1613, 6
        %v1634 = vrot.slane %v1613, 7
        %v1635 = vrot.slane %v1616, 1
        %v1636 = vrot.slane %v1616, 2
        %v1637 = vrot.slane %v1616, 3
        %v1638 = vrot.slane %v1616, 4
        %v1639 = vrot.slane %v1616, 5
        %v1640 = vrot.slane %v1616, 6
        %v1641 = vrot.slane %v1616, 7
        %v1642 = vrot.slane %v1619, 1
        %v1643 = vrot.slane %v1619, 2
        %v1644 = vrot.slane %v1619, 3
        %v1645 = vrot.slane %v1619, 4
        %v1646 = vrot.slane %v1619, 5
        %v1647 = vrot.slane %v1619, 6
        %v1648 = vrot.slane %v1619, 7
        %v1649 = vrot.slane %v1622, 1
        %v1650 = vrot.slane %v1622, 2
        %v1651 = vrot.slane %v1622, 3
        %1652 = vst [vmem:[#allocation1] ss:$9 sm:$0xff] %v1613
        %s1653 = scalar_lea.vmem [#allocation1], 1
        %1654 = vst [vmem:[%s1653] ss:$9 sm:$0xff] %v1628
        %s1655 = scalar_lea.vmem [#allocation1], 2
        %1656 = vst [vmem:[%s1655] ss:$9 sm:$0xff] %v1629
        %s1657 = scalar_lea.vmem [#allocation1], 3
        %1658 = vst [vmem:[%s1657] ss:$9 sm:$0xff] %v1630
        %s1659 = scalar_lea.vmem [#allocation1], 4
        %1660 = vst [vmem:[%s1659] ss:$9 sm:$0xff] %v1631
        %s1661 = scalar_lea.vmem [#allocation1], 5
        %1662 = vst [vmem:[%s1661] ss:$9 sm:$0xff] %v1632
        %s1663 = scalar_lea.vmem [#allocation1], 6
        %1664 = vst [vmem:[%s1663] ss:$9 sm:$0xff] %v1633
        %v1665 = vld [vmem:[#allocation1] sm:$0xff]
        %1666 = vst [vmem:[#allocation1] ss:$9 sm:$0xff] %v1634
        %1667 = vst [vmem:[%s1653] ss:$9 sm:$0xff] %v1616
        %1668 = vst [vmem:[%s1655] ss:$9 sm:$0xff] %v1635
        %1669 = vst [vmem:[%s1657] ss:$9 sm:$0xff] %v1636
        %1670 = vst [vmem:[%s1659] ss:$9 sm:$0xff] %v1637
        %1671 = vst [vmem:[%s1661] ss:$9 sm:$0xff] %v1638
        %1672 = vst [vmem:[%s1663] ss:$9 sm:$0xff] %v1639
        %v1673 = vld [vmem:[#allocation1] sm:$0xff]
        %1674 = vst [vmem:[#allocation1] ss:$9 sm:$0xff] %v1640
        %1675 = vst [vmem:[%s1653] ss:$9 sm:$0xff] %v1641
        %1676 = vst [vmem:[%s1655] ss:$9 sm:$0xff] %v1619
        %1677 = vst [vmem:[%s1657] ss:$9 sm:$0xff] %v1642
        %1678 = vst [vmem:[%s1659] ss:$9 sm:$0xff] %v1643
        %1679 = vst [vmem:[%s1661] ss:$9 sm:$0xff] %v1644
        %1680 = vst [vmem:[%s1663] ss:$9 sm:$0xff] %v1645
        %v1681 = vld [vmem:[#allocation1] sm:$0xff]
        %1682 = vst [vmem:[#allocation1] ss:$9 sm:$0xff] %v1646
        %1683 = vst [vmem:[%s1653] ss:$9 sm:$0xff] %v1647
        %1684 = vst [vmem:[%s1655] ss:$9 sm:$0xff] %v1648
        %1685 = vst [vmem:[%s1657] ss:$9 sm:$0xff] %v1622
        %1686 = vst [vmem:[%s1659] ss:$9 sm:$0xff] %v1649
        %1687 = vst [vmem:[%s1661] ss:$9 sm:$0xff] %v1650
        %1688 = vst [vmem:[%s1663] ss:$9 sm:$0xff] %v1651
        %v1689 = vld [vmem:[#allocation1] sm:$0xff]
        %1694 = vst [vmem:[%s368] sm:$0x7f] %v1665
        %1695 = vst [vmem:[%s368 + $0x8] sm:$0x7f] %v1673
        %1696 = vst [vmem:[%s368 + $0x10] sm:$0x7f] %v1681
        %1697 = vst [vmem:[%s368 + $0x18] sm:$0x7f] %v1689
        %s1698 = smul.u32 4, %s23
        %p1699 = scmp.lt.s32.totalorder %s1698, 7
        %s1700 = scalar_select %p1699, %s1698, 7
        %s1701 = smul.addr %s1700, 8
        %s1702 = scalar_lea.vmem %s7, %s1701
        // Predicated region
        $region69: #{tpu_custom_call.1} parent=47 // pred_check
          %p1703 = pneg %p193
        $region70: #{tpu_custom_call.1} parent=47 // pred_check_branch
          %1705 = sbr.rel (%p1703) target = $region72
        $region71: #{tpu_custom_call.1} parent=47 // pred_region
          %s1706 = smul.u32 4, %s23
        $region72: #{tpu_custom_call.1} parent=47 // pred_fallthru
          _
      $region48: #{tpu_custom_call.1} parent=5 // pred_fallthru
        _
      %p1707 = scmp.le.s32.totalorder 2, %s18
      // Predicated region
      $region73: #{tpu_custom_call.1} parent=5 // pred_check
        %p1708 = pneg %p1707
      $region74: #{tpu_custom_call.1} parent=5 // pred_check_branch
        %1710 = sbr.rel (%p1708) target = $region76
      $region75: #{tpu_custom_call.1} parent=5 // pred_region
        %s1711 = ssub.s32 %s18, 2
        // Predicated region
        $region77: #{tpu_custom_call.1} parent=75 // pred_check
          %p1712 = pneg %p199
        $region78: #{tpu_custom_call.1} parent=75 // pred_check_branch
          %1714 = sbr.rel (%p1712) target = $region80
        $region79: #{tpu_custom_call.1} parent=75 // pred_region
          %s1715 = smul.u32 4, %s24
          %p1716 = scmp.lt.s32.totalorder %s1715, 7
          %s1717 = scalar_select %p1716, %s1715, 7
          %s1718 = smul.addr %s1717, 8
          %s1719 = scalar_lea.vmem %s7, %s1718
        $region80: #{tpu_custom_call.1} parent=75 // pred_fallthru
          _
      $region76: #{tpu_custom_call.1} parent=5 // pred_fallthru
        _
    $region6: #{tpu_custom_call.1} parent=1 // loop_footer
      %s22 = sadd.s32 1, %s18
    $region7: #{tpu_custom_call.1} parent=1 // loop_footer_branch
      %17 = sbr.rel target = $region3
    $region8: #{tpu_custom_call.1} parent=1 // loop_exit
      _
    %1720 = vsyncpa [#allocation4], 1
    %s1721 = scalar_lea.sflag [#allocation4], 1
    %1722 = vsyncpa %s1721, 1
    %1723 = vsyncpa [#allocation6], 1
    %1724 = vsyncpa [#allocation9], 1

</llo_original>
